<compile_context>
chip_gen: v6e
topology: v6e:2x2x1
jax: 0.10.0
libtpu: 0.0.40
codegen_flags: <defaults>
</compile_context>

<pallas_src>
import functools

import jax
import jax.numpy as jnp
from jax import lax
from jax.experimental import pallas as pl
from jax.experimental.pallas import tpu as pltpu


def _round_up(v, m):
    return -(-v // m) * m


def _sam_kernel(x_ref, ximg_ref, w12_ref, w3_ref, x1_ref, img_ref,
                xv_ref, imgv_ref, *, H, W, C, K, P, CP, TP, IMG_OFF, L):
    """Fused SAM forward for one batch element (spatial-on-lanes layout).

    x_ref    : (1, C, HW)        unpadded x, flattened
    ximg_ref : (1, 3, HW)        degraded image, flattened
    w12_ref  : (K, C+3, K*CP)    conv1|conv2 weights grouped by dx, taps stacked
    w3_ref   : (K, C, K*TP)      conv3 weights grouped by dx, taps stacked
    x1_ref   : (1, C, HW)
    img_ref  : (1, 3, HW)
    xv_ref   : (CP, L)  VMEM scratch: padded-flat conv1/conv2 input
    imgv_ref : (TP, L)  VMEM scratch: padded-flat conv3 input
    """
    HW = H * W
    TAIL = L - IMG_OFF - HW
    f32 = jnp.float32

    # --- stage x into the padded-flat VMEM scratch --------------------------
    # Borders / pad-channel rows are re-zeroed every grid step (cheap, a few
    # hundred lanes) so the kernel stays correct when the "parallel" batch axis
    # is split across TensorCores; the interior is fully overwritten each step.
    if IMG_OFF > 0:
        xv_ref[:, :IMG_OFF] = jnp.zeros((CP, IMG_OFF), f32)
    if TAIL > 0:
        xv_ref[:, IMG_OFF + HW:] = jnp.zeros((CP, TAIL), f32)
    if CP > C:
        xv_ref[C:, IMG_OFF:IMG_OFF + HW] = jnp.zeros((CP - C, HW), f32)
    xv_ref[:C, IMG_OFF:IMG_OFF + HW] = x_ref[0].astype(f32)

    # --- hoisted horizontal wrap masks (one per non-centre dx, shared) ------
    col = lax.broadcasted_iota(jnp.int32, (1, HW), 1) % W
    masks = {}
    for dx in range(K):
        dxs = dx - P
        if dxs != 0:
            masks[dx] = (col >= -dxs) & (col < W - dxs)

    def conv_taps(src_ref, w_ref):
        """KxK conv as K dx-grouped MXU dots over the padded-flat src Ref.

        For each dx, the K taps sharing that dx are stacked on the contraction
        axis: (C_out, K*rows) @ (K*rows, HW); one mask select per group.
        Vertical out-of-range taps read the zero rows baked into the flat
        layout, so they need no mask.
        """
        acc = None
        for dx in range(K):
            parts = []
            for dy in range(K):
                start = IMG_OFF + (dy - P) * W + (dx - P)   # static lane offset
                parts.append(src_ref[:, start:start + HW])  # (rows, HW) f32
            patch = jnp.concatenate(parts, axis=0)          # (K*rows, HW)
            if dx in masks:
                patch = jnp.where(masks[dx], patch, 0.0)
            contrib = jnp.dot(w_ref[dx], patch, preferred_element_type=f32)
            acc = contrib if acc is None else acc + contrib
        return acc

    # Fused conv1(x) | conv2(x): rows [0, C) are conv1, rows [C, C+3) conv2.
    acc12 = conv_taps(xv_ref, w12_ref)                       # (C+3, HW)

    # img = conv2(x) + x_img   (lane-dense (3, HW) store)
    img = acc12[C:] + ximg_ref[0].astype(f32)
    img_ref[0] = img.astype(img_ref.dtype)

    # Stage img into the padded-flat scratch for conv3.
    if IMG_OFF > 0:
        imgv_ref[:, :IMG_OFF] = jnp.zeros((TP, IMG_OFF), f32)
    if TAIL > 0:
        imgv_ref[:, IMG_OFF + HW:] = jnp.zeros((TP, TAIL), f32)
    if TP > 3:
        imgv_ref[3:, IMG_OFF:IMG_OFF + HW] = jnp.zeros((TP - 3, HW), f32)
    imgv_ref[:3, IMG_OFF:IMG_OFF + HW] = img

    # x1 = conv1(x) * sigmoid(conv3(img)) + x    (x reloaded: short live range)
    acc3 = conv_taps(imgv_ref, w3_ref)                       # (C, HW)
    x1 = acc12[:C] * jax.nn.sigmoid(acc3) + x_ref[0].astype(f32)
    x1_ref[0] = x1.astype(x1_ref.dtype)


def sam_forward(x_nchw, ximg_nchw, w1_oihw, w2_oihw, w3_oihw):
    """SAM.forward.  Inputs/weights use PyTorch layouts (NCHW / OIHW).

    Outputs keep the input dtype; accumulation is f32 inside the kernel, so
    bf16 I/O (halved HBM traffic) works unchanged.
    """
    N, C, H, W = x_nchw.shape
    K = w1_oihw.shape[-1]
    P = K // 2
    HW = H * W

    # Padded-flat layout: [guard | P*W zero rows | image | P*W zero rows | guard]
    # with the leading guard rounded up to a lane multiple so interior scratch
    # stores / loads are lane-aligned.
    guard = _round_up(P * W + P, 128) if (P * W + P) > 0 else 0
    IMG_OFF = guard
    L = IMG_OFF + HW + guard

    # Sublane-padded channel counts so per-dy patch slices are tile-aligned.
    CP = _round_up(C, 8)
    TP = _round_up(3, 8)

    x_flat = x_nchw.reshape(N, C, HW)
    ximg_flat = ximg_nchw.reshape(N, 3, HW)

    # Weights grouped by dx, with the (dy, c_in) taps stacked on the
    # contraction axis: wg[dx][c_out, dy*CP + c_in] = w[c_out, c_in, dy, dx].
    w12 = jnp.concatenate([w1_oihw, w2_oihw], axis=0)              # (C+3, C, K, K)
    w12t = jnp.transpose(w12, (3, 0, 2, 1))                        # (K, C+3, K, C)
    w12t = jnp.pad(w12t, ((0, 0), (0, 0), (0, 0), (0, CP - C)))
    w12g = w12t.reshape(K, C + 3, K * CP).astype(jnp.float32)
    w3t = jnp.transpose(w3_oihw, (3, 0, 2, 1))                     # (K, C, K, 3)
    w3t = jnp.pad(w3t, ((0, 0), (0, 0), (0, 0), (0, TP - 3)))
    w3g = w3t.reshape(K, C, K * TP).astype(jnp.float32)

    kernel = functools.partial(_sam_kernel, H=H, W=W, C=C, K=K, P=P,
                               CP=CP, TP=TP, IMG_OFF=IMG_OFF, L=L)

    itemsize = jnp.dtype(x_nchw.dtype).itemsize
    flops = N * HW * (2 * (C + 3) * K * K * C      # conv1 | conv2
                      + 2 * C * K * K * 3          # conv3
                      + 2 * C + 3)                 # elementwise
    bytes_accessed = (N * HW * (2 * C + 6) * itemsize
                      + 4 * (w12g.size + w3g.size))
    cost = pl.CostEstimate(flops=flops, transcendentals=N * C * HW,
                           bytes_accessed=bytes_accessed)

    x1, img = pl.pallas_call(
        kernel,
        out_shape=(jax.ShapeDtypeStruct((N, C, HW), x_nchw.dtype),
                   jax.ShapeDtypeStruct((N, 3, HW), x_nchw.dtype)),
        grid=(N,),
        in_specs=[
            pl.BlockSpec((1, C, HW), lambda b: (b, 0, 0)),
            pl.BlockSpec((1, 3, HW), lambda b: (b, 0, 0)),
            pl.BlockSpec((K, C + 3, K * CP), lambda b: (0, 0, 0)),
            pl.BlockSpec((K, C, K * TP), lambda b: (0, 0, 0)),
        ],
        out_specs=(
            pl.BlockSpec((1, C, HW), lambda b: (b, 0, 0)),
            pl.BlockSpec((1, 3, HW), lambda b: (b, 0, 0)),
        ),
        scratch_shapes=[pltpu.VMEM((CP, L), jnp.float32),
                        pltpu.VMEM((TP, L), jnp.float32)],
        compiler_params=pltpu.CompilerParams(
            dimension_semantics=("parallel",),
            vmem_limit_bytes=32 * 1024 * 1024),
        cost_estimate=cost,
    )(x_flat, ximg_flat, w12g, w3g)

    return x1.reshape(N, C, H, W), img.reshape(N, 3, H, W)


def _conv_ref(x, w, pad):
    return lax.conv_general_dilated(
        x, w, window_strides=(1, 1), padding=[(pad, pad), (pad, pad)],
        dimension_numbers=("NCHW", "OIHW", "NCHW"))


def _sam_ref(x, x_img, w1, w2, w3, pad):
    x1 = _conv_ref(x, w1, pad)
    img = _conv_ref(x, w2, pad) + x_img
    x2 = jax.nn.sigmoid(_conv_ref(img, w3, pad))
    return x1 * x2 + x, img


if __name__ == "__main__":
    # Small shapes consistent with SAM(n_feat=4, kernel_size=3, bias=False).
    N, n_feat, H, W, K = 2, 4, 16, 16, 3
    P = K // 2

    key = jax.random.PRNGKey(0)
    k_x, k_img, k_w1, k_w2, k_w3 = jax.random.split(key, 5)

    x = jax.random.normal(k_x, (N, n_feat, H, W), jnp.float32)
    x_img = jax.random.normal(k_img, (N, 3, H, W), jnp.float32)

    # Deterministic synthetic weights (PyTorch OIHW layout), bias=False.
    w1 = 0.1 * jax.random.normal(k_w1, (n_feat, n_feat, K, K), jnp.float32)
    w2 = 0.1 * jax.random.normal(k_w2, (3, n_feat, K, K), jnp.float32)
    w3 = 0.1 * jax.random.normal(k_w3, (n_feat, 3, K, K), jnp.float32)

    x1_out, img_out = sam_forward(x, x_img, w1, w2, w3)
    jax.block_until_ready((x1_out, img_out))

    x1_want, img_want = _sam_ref(x, x_img, w1, w2, w3, P)
    assert jnp.allclose(x1_out, x1_want, atol=1e-3, rtol=1e-3), "x1 mismatch"
    assert jnp.allclose(img_out, img_want, atol=1e-3, rtol=1e-3), "img mismatch"

    print("KERNEL_OK")
</pallas_src>

<mosaic_0001>
module attributes {stable_mosaic.version = 11 : i64} {
  func.func @_sam_kernel(%arg0: i32, %arg1: memref<1x4x256xf32, #tpu.memory_space<vmem>>, %arg2: memref<1x3x256xf32, #tpu.memory_space<vmem>>, %arg3: memref<3x7x24xf32, #tpu.memory_space<vmem>>, %arg4: memref<3x4x24xf32, #tpu.memory_space<vmem>>, %arg5: memref<1x4x256xf32, #tpu.memory_space<vmem>>, %arg6: memref<1x3x256xf32, #tpu.memory_space<vmem>>, %arg7: memref<8x512xf32, #tpu.memory_space<vmem>>, %arg8: memref<8x512xf32, #tpu.memory_space<vmem>>) attributes {dimension_semantics = [#tpu.dimension_semantics<parallel>], iteration_bounds = array<i64: 2>, scalar_prefetch = 0 : i64, scratch_operands = 2 : i64, tpu.core_type = #tpu.core_type<tc>, window_params = [{transform_indices = @transform_0, window_bounds = array<i64: 1, 4, 256>}, {transform_indices = @transform_1, window_bounds = array<i64: 1, 3, 256>}, {pipeline_mode = #tpu.pipeline_mode<synchronous>, transform_indices = @transform_2, window_bounds = array<i64: 3, 7, 24>}, {pipeline_mode = #tpu.pipeline_mode<synchronous>, transform_indices = @transform_3, window_bounds = array<i64: 3, 4, 24>}, {transform_indices = @transform_4, window_bounds = array<i64: 1, 4, 256>}, {transform_indices = @transform_5, window_bounds = array<i64: 1, 3, 256>}]} {
    %cst = arith.constant 0.000000e+00 : f32
    %0 = vector.broadcast %cst : f32 to vector<8x128xf32>
    %c0 = arith.constant 0 : index
    %c0_0 = arith.constant 0 : index
    %1 = vector.load %arg7[%c0, %c0_0] : memref<8x512xf32, #tpu.memory_space<vmem>>, vector<8x128xf32>
    tpu.vector_store %arg7[%c0, %c0_0], %0 {strides = array<i32>} : memref<8x512xf32, #tpu.memory_space<vmem>>, vector<8x128xf32>,
    %cst_1 = arith.constant 0.000000e+00 : f32
    %2 = vector.broadcast %cst_1 : f32 to vector<8x128xf32>
    %c0_2 = arith.constant 0 : index
    %c384 = arith.constant 384 : index
    %3 = vector.load %arg7[%c0_2, %c384] : memref<8x512xf32, #tpu.memory_space<vmem>>, vector<8x128xf32>
    tpu.vector_store %arg7[%c0_2, %c384], %2 {strides = array<i32>} : memref<8x512xf32, #tpu.memory_space<vmem>>, vector<8x128xf32>,
    %cst_3 = arith.constant 0.000000e+00 : f32
    %4 = vector.broadcast %cst_3 : f32 to vector<4x256xf32>
    %c4 = arith.constant 4 : index
    %c128 = arith.constant 128 : index
    %5 = vector.load %arg7[%c4, %c128] : memref<8x512xf32, #tpu.memory_space<vmem>>, vector<4x256xf32>
    tpu.vector_store %arg7[%c4, %c128], %4 {strides = array<i32>} : memref<8x512xf32, #tpu.memory_space<vmem>>, vector<4x256xf32>,
    %c0_4 = arith.constant 0 : index
    %c0_5 = arith.constant 0 : index
    %c0_6 = arith.constant 0 : index
    %6 = vector.load %arg1[%c0_4, %c0_5, %c0_6] : memref<1x4x256xf32, #tpu.memory_space<vmem>>, vector<1x4x256xf32>
    %7 = vector.shape_cast %6 : vector<1x4x256xf32> to vector<4x256xf32>
    %c0_7 = arith.constant 0 : index
    %c128_8 = arith.constant 128 : index
    %8 = vector.load %arg7[%c0_7, %c128_8] : memref<8x512xf32, #tpu.memory_space<vmem>>, vector<4x256xf32>
    tpu.vector_store %arg7[%c0_7, %c128_8], %7 {strides = array<i32>} : memref<8x512xf32, #tpu.memory_space<vmem>>, vector<4x256xf32>,
    %9 = tpu.iota {dimensions = array<i32: 1>} : vector<1x256xi32>
    %c16_i32 = arith.constant 16 : i32
    %c0_i32 = arith.constant 0 : i32
    %10 = arith.cmpi eq, %c16_i32, %c0_i32 : i32
    %c1_i32 = arith.constant 1 : i32
    %11 = arith.select %10, %c1_i32, %c16_i32 : i32
    %12 = vector.broadcast %11 : i32 to vector<1x256xi32>
    %13 = arith.remsi %9, %12 : vector<1x256xi32>
    %c0_i32_9 = arith.constant 0 : i32
    %14 = vector.broadcast %c0_i32_9 : i32 to vector<1x256xi32>
    %15 = arith.cmpi ne, %13, %14 : vector<1x256xi32>
    %c0_i32_10 = arith.constant 0 : i32
    %16 = vector.broadcast %c0_i32_10 : i32 to vector<1x256xi32>
    %17 = arith.cmpi slt, %13, %16 : vector<1x256xi32>
    %c0_i32_11 = arith.constant 0 : i32
    %18 = arith.cmpi slt, %11, %c0_i32_11 : i32
    %19 = vector.broadcast %18 : i1 to vector<1x256xi1>
    %20 = vector.broadcast %19 : vector<1x256xi1> to vector<1x256xi1>
    %21 = arith.xori %17, %20 : vector<1x256xi1>
    %22 = arith.andi %21, %15 : vector<1x256xi1>
    %23 = vector.broadcast %11 : i32 to vector<1x256xi32>
    %24 = arith.addi %13, %23 : vector<1x256xi32>
    %25 = arith.select %22, %24, %13 : vector<1x256xi1>, vector<1x256xi32>
    %c1_i32_12 = arith.constant 1 : i32
    %26 = vector.broadcast %c1_i32_12 : i32 to vector<1x256xi32>
    %27 = arith.cmpi sge, %25, %26 : vector<1x256xi32>
    %c17_i32 = arith.constant 17 : i32
    %28 = vector.broadcast %c17_i32 : i32 to vector<1x256xi32>
    %29 = arith.cmpi slt, %25, %28 : vector<1x256xi32>
    %30 = arith.andi %27, %29 : vector<1x256xi1>
    %c-1_i32 = arith.constant -1 : i32
    %31 = vector.broadcast %c-1_i32 : i32 to vector<1x256xi32>
    %32 = arith.cmpi sge, %25, %31 : vector<1x256xi32>
    %c15_i32 = arith.constant 15 : i32
    %33 = vector.broadcast %c15_i32 : i32 to vector<1x256xi32>
    %34 = arith.cmpi slt, %25, %33 : vector<1x256xi32>
    %35 = arith.andi %32, %34 : vector<1x256xi1>
    %c0_13 = arith.constant 0 : index
    %c111 = arith.constant 111 : index
    %36 = vector.load %arg7[%c0_13, %c111] : memref<8x512xf32, #tpu.memory_space<vmem>>, vector<8x256xf32>
    %c0_14 = arith.constant 0 : index
    %c127 = arith.constant 127 : index
    %37 = vector.load %arg7[%c0_14, %c127] : memref<8x512xf32, #tpu.memory_space<vmem>>, vector<8x256xf32>
    %c0_15 = arith.constant 0 : index
    %c143 = arith.constant 143 : index
    %38 = vector.load %arg7[%c0_15, %c143] : memref<8x512xf32, #tpu.memory_space<vmem>>, vector<8x256xf32>
    %39 = tpu.concatenate %36, %37, %38 in 0 : vector<8x256xf32>, vector<8x256xf32>, vector<8x256xf32> -> vector<24x256xf32>
    %cst_16 = arith.constant 0.000000e+00 : f32
    %40 = vector.shape_cast %30 : vector<1x256xi1> to vector<1x256xi1>
    %41 = vector.broadcast %40 : vector<1x256xi1> to vector<24x256xi1>
    %42 = vector.broadcast %cst_16 : f32 to vector<24x256xf32>
    %43 = arith.select %41, %39, %42 : vector<24x256xi1>, vector<24x256xf32>
    %c0_17 = arith.constant 0 : index
    %c0_18 = arith.constant 0 : index
    %c0_19 = arith.constant 0 : index
    %44 = vector.load %arg3[%c0_17, %c0_18, %c0_19] : memref<3x7x24xf32, #tpu.memory_space<vmem>>, vector<1x7x24xf32>
    %45 = vector.shape_cast %44 : vector<1x7x24xf32> to vector<7x24xf32>
    %cst_20 = arith.constant dense<0.000000e+00> : vector<7x256xf32>
    %46 = tpu.matmul %45, %43, %cst_20 {dimension_numbers = #tpu.dot_dimension_numbers<[1], [0], [0], [1], [0, 0, 1, 1], [], []>} : vector<7x24xf32>, vector<24x256xf32>, vector<7x256xf32> -> vector<7x256xf32>
    %c0_21 = arith.constant 0 : index
    %c112 = arith.constant 112 : index
    %47 = vector.load %arg7[%c0_21, %c112] : memref<8x512xf32, #tpu.memory_space<vmem>>, vector<8x256xf32>
    %c0_22 = arith.constant 0 : index
    %c128_23 = arith.constant 128 : index
    %48 = vector.load %arg7[%c0_22, %c128_23] : memref<8x512xf32, #tpu.memory_space<vmem>>, vector<8x256xf32>
    %c0_24 = arith.constant 0 : index
    %c144 = arith.constant 144 : index
    %49 = vector.load %arg7[%c0_24, %c144] : memref<8x512xf32, #tpu.memory_space<vmem>>, vector<8x256xf32>
    %50 = tpu.concatenate %47, %48, %49 in 0 : vector<8x256xf32>, vector<8x256xf32>, vector<8x256xf32> -> vector<24x256xf32>
    %c1 = arith.constant 1 : index
    %c0_25 = arith.constant 0 : index
    %c0_26 = arith.constant 0 : index
    %51 = vector.load %arg3[%c1, %c0_25, %c0_26] : memref<3x7x24xf32, #tpu.memory_space<vmem>>, vector<1x7x24xf32>
    %52 = vector.shape_cast %51 : vector<1x7x24xf32> to vector<7x24xf32>
    %cst_27 = arith.constant dense<0.000000e+00> : vector<7x256xf32>
    %53 = tpu.matmul %52, %50, %cst_27 {dimension_numbers = #tpu.dot_dimension_numbers<[1], [0], [0], [1], [0, 0, 1, 1], [], []>} : vector<7x24xf32>, vector<24x256xf32>, vector<7x256xf32> -> vector<7x256xf32>
    %54 = arith.addf %46, %53 : vector<7x256xf32>
    %c0_28 = arith.constant 0 : index
    %c113 = arith.constant 113 : index
    %55 = vector.load %arg7[%c0_28, %c113] : memref<8x512xf32, #tpu.memory_space<vmem>>, vector<8x256xf32>
    %c0_29 = arith.constant 0 : index
    %c129 = arith.constant 129 : index
    %56 = vector.load %arg7[%c0_29, %c129] : memref<8x512xf32, #tpu.memory_space<vmem>>, vector<8x256xf32>
    %c0_30 = arith.constant 0 : index
    %c145 = arith.constant 145 : index
    %57 = vector.load %arg7[%c0_30, %c145] : memref<8x512xf32, #tpu.memory_space<vmem>>, vector<8x256xf32>
    %58 = tpu.concatenate %55, %56, %57 in 0 : vector<8x256xf32>, vector<8x256xf32>, vector<8x256xf32> -> vector<24x256xf32>
    %cst_31 = arith.constant 0.000000e+00 : f32
    %59 = vector.shape_cast %35 : vector<1x256xi1> to vector<1x256xi1>
    %60 = vector.broadcast %59 : vector<1x256xi1> to vector<24x256xi1>
    %61 = vector.broadcast %cst_31 : f32 to vector<24x256xf32>
    %62 = arith.select %60, %58, %61 : vector<24x256xi1>, vector<24x256xf32>
    %c2 = arith.constant 2 : index
    %c0_32 = arith.constant 0 : index
    %c0_33 = arith.constant 0 : index
    %63 = vector.load %arg3[%c2, %c0_32, %c0_33] : memref<3x7x24xf32, #tpu.memory_space<vmem>>, vector<1x7x24xf32>
    %64 = vector.shape_cast %63 : vector<1x7x24xf32> to vector<7x24xf32>
    %cst_34 = arith.constant dense<0.000000e+00> : vector<7x256xf32>
    %65 = tpu.matmul %64, %62, %cst_34 {dimension_numbers = #tpu.dot_dimension_numbers<[1], [0], [0], [1], [0, 0, 1, 1], [], []>} : vector<7x24xf32>, vector<24x256xf32>, vector<7x256xf32> -> vector<7x256xf32>
    %66 = arith.addf %54, %65 : vector<7x256xf32>
    %67 = vector.extract_strided_slice %66 {offsets = [4, 0], sizes = [3, 256], strides = [1, 1]} : vector<7x256xf32> to vector<3x256xf32>
    %c0_35 = arith.constant 0 : index
    %c0_36 = arith.constant 0 : index
    %c0_37 = arith.constant 0 : index
    %68 = vector.load %arg2[%c0_35, %c0_36, %c0_37] : memref<1x3x256xf32, #tpu.memory_space<vmem>>, vector<1x3x256xf32>
    %69 = vector.shape_cast %68 : vector<1x3x256xf32> to vector<3x256xf32>
    %70 = arith.addf %67, %69 : vector<3x256xf32>
    %c0_38 = arith.constant 0 : index
    %c0_39 = arith.constant 0 : index
    %c0_40 = arith.constant 0 : index
    %71 = vector.load %arg6[%c0_38, %c0_39, %c0_40] : memref<1x3x256xf32, #tpu.memory_space<vmem>>, vector<1x3x256xf32>
    %72 = vector.shape_cast %71 : vector<1x3x256xf32> to vector<3x256xf32>
    %73 = vector.shape_cast %70 : vector<3x256xf32> to vector<1x3x256xf32>
    tpu.vector_store %arg6[%c0_38, %c0_39, %c0_40], %73 {strides = array<i32>} : memref<1x3x256xf32, #tpu.memory_space<vmem>>, vector<1x3x256xf32>,
    %cst_41 = arith.constant 0.000000e+00 : f32
    %74 = vector.broadcast %cst_41 : f32 to vector<8x128xf32>
    %c0_42 = arith.constant 0 : index
    %c0_43 = arith.constant 0 : index
    %75 = vector.load %arg8[%c0_42, %c0_43] : memref<8x512xf32, #tpu.memory_space<vmem>>, vector<8x128xf32>
    tpu.vector_store %arg8[%c0_42, %c0_43], %74 {strides = array<i32>} : memref<8x512xf32, #tpu.memory_space<vmem>>, vector<8x128xf32>,
    %cst_44 = arith.constant 0.000000e+00 : f32
    %76 = vector.broadcast %cst_44 : f32 to vector<8x128xf32>
    %c0_45 = arith.constant 0 : index
    %c384_46 = arith.constant 384 : index
    %77 = vector.load %arg8[%c0_45, %c384_46] : memref<8x512xf32, #tpu.memory_space<vmem>>, vector<8x128xf32>
    tpu.vector_store %arg8[%c0_45, %c384_46], %76 {strides = array<i32>} : memref<8x512xf32, #tpu.memory_space<vmem>>, vector<8x128xf32>,
    %cst_47 = arith.constant 0.000000e+00 : f32
    %78 = vector.broadcast %cst_47 : f32 to vector<5x256xf32>
    %c3 = arith.constant 3 : index
    %c128_48 = arith.constant 128 : index
    %79 = vector.load %arg8[%c3, %c128_48] : memref<8x512xf32, #tpu.memory_space<vmem>>, vector<5x256xf32>
    tpu.vector_store %arg8[%c3, %c128_48], %78 {strides = array<i32>} : memref<8x512xf32, #tpu.memory_space<vmem>>, vector<5x256xf32>,
    %c0_49 = arith.constant 0 : index
    %c128_50 = arith.constant 128 : index
    %80 = vector.load %arg8[%c0_49, %c128_50] : memref<8x512xf32, #tpu.memory_space<vmem>>, vector<3x256xf32>
    tpu.vector_store %arg8[%c0_49, %c128_50], %70 {strides = array<i32>} : memref<8x512xf32, #tpu.memory_space<vmem>>, vector<3x256xf32>,
    %c0_51 = arith.constant 0 : index
    %c111_52 = arith.constant 111 : index
    %81 = vector.load %arg8[%c0_51, %c111_52] : memref<8x512xf32, #tpu.memory_space<vmem>>, vector<8x256xf32>
    %c0_53 = arith.constant 0 : index
    %c127_54 = arith.constant 127 : index
    %82 = vector.load %arg8[%c0_53, %c127_54] : memref<8x512xf32, #tpu.memory_space<vmem>>, vector<8x256xf32>
    %c0_55 = arith.constant 0 : index
    %c143_56 = arith.constant 143 : index
    %83 = vector.load %arg8[%c0_55, %c143_56] : memref<8x512xf32, #tpu.memory_space<vmem>>, vector<8x256xf32>
    %84 = tpu.concatenate %81, %82, %83 in 0 : vector<8x256xf32>, vector<8x256xf32>, vector<8x256xf32> -> vector<24x256xf32>
    %cst_57 = arith.constant 0.000000e+00 : f32
    %85 = vector.shape_cast %30 : vector<1x256xi1> to vector<1x256xi1>
    %86 = vector.broadcast %85 : vector<1x256xi1> to vector<24x256xi1>
    %87 = vector.broadcast %cst_57 : f32 to vector<24x256xf32>
    %88 = arith.select %86, %84, %87 : vector<24x256xi1>, vector<24x256xf32>
    %c0_58 = arith.constant 0 : index
    %c0_59 = arith.constant 0 : index
    %c0_60 = arith.constant 0 : index
    %89 = vector.load %arg4[%c0_58, %c0_59, %c0_60] : memref<3x4x24xf32, #tpu.memory_space<vmem>>, vector<1x4x24xf32>
    %90 = vector.shape_cast %89 : vector<1x4x24xf32> to vector<4x24xf32>
    %cst_61 = arith.constant dense<0.000000e+00> : vector<4x256xf32>
    %91 = tpu.matmul %90, %88, %cst_61 {dimension_numbers = #tpu.dot_dimension_numbers<[1], [0], [0], [1], [0, 0, 1, 1], [], []>} : vector<4x24xf32>, vector<24x256xf32>, vector<4x256xf32> -> vector<4x256xf32>
    %c0_62 = arith.constant 0 : index
    %c112_63 = arith.constant 112 : index
    %92 = vector.load %arg8[%c0_62, %c112_63] : memref<8x512xf32, #tpu.memory_space<vmem>>, vector<8x256xf32>
    %c0_64 = arith.constant 0 : index
    %c128_65 = arith.constant 128 : index
    %93 = vector.load %arg8[%c0_64, %c128_65] : memref<8x512xf32, #tpu.memory_space<vmem>>, vector<8x256xf32>
    %c0_66 = arith.constant 0 : index
    %c144_67 = arith.constant 144 : index
    %94 = vector.load %arg8[%c0_66, %c144_67] : memref<8x512xf32, #tpu.memory_space<vmem>>, vector<8x256xf32>
    %95 = tpu.concatenate %92, %93, %94 in 0 : vector<8x256xf32>, vector<8x256xf32>, vector<8x256xf32> -> vector<24x256xf32>
    %c1_68 = arith.constant 1 : index
    %c0_69 = arith.constant 0 : index
    %c0_70 = arith.constant 0 : index
    %96 = vector.load %arg4[%c1_68, %c0_69, %c0_70] : memref<3x4x24xf32, #tpu.memory_space<vmem>>, vector<1x4x24xf32>
    %97 = vector.shape_cast %96 : vector<1x4x24xf32> to vector<4x24xf32>
    %cst_71 = arith.constant dense<0.000000e+00> : vector<4x256xf32>
    %98 = tpu.matmul %97, %95, %cst_71 {dimension_numbers = #tpu.dot_dimension_numbers<[1], [0], [0], [1], [0, 0, 1, 1], [], []>} : vector<4x24xf32>, vector<24x256xf32>, vector<4x256xf32> -> vector<4x256xf32>
    %99 = arith.addf %91, %98 : vector<4x256xf32>
    %c0_72 = arith.constant 0 : index
    %c113_73 = arith.constant 113 : index
    %100 = vector.load %arg8[%c0_72, %c113_73] : memref<8x512xf32, #tpu.memory_space<vmem>>, vector<8x256xf32>
    %c0_74 = arith.constant 0 : index
    %c129_75 = arith.constant 129 : index
    %101 = vector.load %arg8[%c0_74, %c129_75] : memref<8x512xf32, #tpu.memory_space<vmem>>, vector<8x256xf32>
    %c0_76 = arith.constant 0 : index
    %c145_77 = arith.constant 145 : index
    %102 = vector.load %arg8[%c0_76, %c145_77] : memref<8x512xf32, #tpu.memory_space<vmem>>, vector<8x256xf32>
    %103 = tpu.concatenate %100, %101, %102 in 0 : vector<8x256xf32>, vector<8x256xf32>, vector<8x256xf32> -> vector<24x256xf32>
    %cst_78 = arith.constant 0.000000e+00 : f32
    %104 = vector.shape_cast %35 : vector<1x256xi1> to vector<1x256xi1>
    %105 = vector.broadcast %104 : vector<1x256xi1> to vector<24x256xi1>
    %106 = vector.broadcast %cst_78 : f32 to vector<24x256xf32>
    %107 = arith.select %105, %103, %106 : vector<24x256xi1>, vector<24x256xf32>
    %c2_79 = arith.constant 2 : index
    %c0_80 = arith.constant 0 : index
    %c0_81 = arith.constant 0 : index
    %108 = vector.load %arg4[%c2_79, %c0_80, %c0_81] : memref<3x4x24xf32, #tpu.memory_space<vmem>>, vector<1x4x24xf32>
    %109 = vector.shape_cast %108 : vector<1x4x24xf32> to vector<4x24xf32>
    %cst_82 = arith.constant dense<0.000000e+00> : vector<4x256xf32>
    %110 = tpu.matmul %109, %107, %cst_82 {dimension_numbers = #tpu.dot_dimension_numbers<[1], [0], [0], [1], [0, 0, 1, 1], [], []>} : vector<4x24xf32>, vector<24x256xf32>, vector<4x256xf32> -> vector<4x256xf32>
    %111 = arith.addf %99, %110 : vector<4x256xf32>
    %112 = vector.extract_strided_slice %66 {offsets = [0, 0], sizes = [4, 256], strides = [1, 1]} : vector<7x256xf32> to vector<4x256xf32>
    %113 = arith.negf %111 : vector<4x256xf32>
    %114 = math.exp %113 : vector<4x256xf32>
    %cst_83 = arith.constant 1.000000e+00 : f32
    %115 = vector.broadcast %cst_83 : f32 to vector<4x256xf32>
    %116 = arith.addf %115, %114 : vector<4x256xf32>
    %117 = arith.divf %115, %116 : vector<4x256xf32>
    %118 = arith.mulf %112, %117 : vector<4x256xf32>
    %c0_84 = arith.constant 0 : index
    %c0_85 = arith.constant 0 : index
    %c0_86 = arith.constant 0 : index
    %119 = vector.load %arg1[%c0_84, %c0_85, %c0_86] : memref<1x4x256xf32, #tpu.memory_space<vmem>>, vector<1x4x256xf32>
    %120 = vector.shape_cast %119 : vector<1x4x256xf32> to vector<4x256xf32>
    %121 = arith.addf %118, %120 : vector<4x256xf32>
    %c0_87 = arith.constant 0 : index
    %c0_88 = arith.constant 0 : index
    %c0_89 = arith.constant 0 : index
    %122 = vector.load %arg5[%c0_87, %c0_88, %c0_89] : memref<1x4x256xf32, #tpu.memory_space<vmem>>, vector<1x4x256xf32>
    %123 = vector.shape_cast %122 : vector<1x4x256xf32> to vector<4x256xf32>
    %124 = vector.shape_cast %121 : vector<4x256xf32> to vector<1x4x256xf32>
    tpu.vector_store %arg5[%c0_87, %c0_88, %c0_89], %124 {strides = array<i32>} : memref<1x4x256xf32, #tpu.memory_space<vmem>>, vector<1x4x256xf32>,
    return
  }
  func.func @transform_0(%arg0: i32) -> (i32, i32, i32) {
    %c0_i32 = arith.constant 0 : i32
    %c0_i32_0 = arith.constant 0 : i32
    %c0_i32_1 = arith.constant 0 : i32
    return %arg0, %c0_i32, %c0_i32_0 : i32, i32, i32
  }
  func.func @transform_1(%arg0: i32) -> (i32, i32, i32) {
    %c0_i32 = arith.constant 0 : i32
    %c0_i32_0 = arith.constant 0 : i32
    %c0_i32_1 = arith.constant 0 : i32
    return %arg0, %c0_i32, %c0_i32_0 : i32, i32, i32
  }
  func.func @transform_2(%arg0: i32) -> (i32, i32, i32) {
    %c0_i32 = arith.constant 0 : i32
    %c0_i32_0 = arith.constant 0 : i32
    %c0_i32_1 = arith.constant 0 : i32
    %c0_i32_2 = arith.constant 0 : i32
    return %c0_i32, %c0_i32_0, %c0_i32_1 : i32, i32, i32
  }
  func.func @transform_3(%arg0: i32) -> (i32, i32, i32) {
    %c0_i32 = arith.constant 0 : i32
    %c0_i32_0 = arith.constant 0 : i32
    %c0_i32_1 = arith.constant 0 : i32
    %c0_i32_2 = arith.constant 0 : i32
    return %c0_i32, %c0_i32_0, %c0_i32_1 : i32, i32, i32
  }
  func.func @transform_4(%arg0: i32) -> (i32, i32, i32) {
    %c0_i32 = arith.constant 0 : i32
    %c0_i32_0 = arith.constant 0 : i32
    %c0_i32_1 = arith.constant 0 : i32
    return %arg0, %c0_i32, %c0_i32_0 : i32, i32, i32
  }
  func.func @transform_5(%arg0: i32) -> (i32, i32, i32) {
    %c0_i32 = arith.constant 0 : i32
    %c0_i32_0 = arith.constant 0 : i32
    %c0_i32_1 = arith.constant 0 : i32
    return %arg0, %c0_i32, %c0_i32_0 : i32, i32, i32
  }
}

</mosaic_0001>

<llo_original>
// kernel: tpu_custom_call.1
$region0: #{tpu_custom_call.1}
  #allocation0 [shape = 'u32[]', space=smem, size = 0x4, offset = 0x4, fixed_abs, tag = 'smem constant byte address 0x4 - core index']
  #allocation1 [shape = 'u32[144,128]{1,0:T(1,128)}', space=vmem, size = 0x12000, scoped, tag = 'internal scratch']
  #allocation2 [shape = 'f32[8,512]{1,0:T(8,128)}', space=vmem, size = 0x4000, scoped, tag = 'scratch operand']
  #allocation3 [shape = 'f32[8,512]{1,0:T(8,128)}', space=vmem, size = 0x4000, scoped, tag = 'scratch operand']
  %s0 = inlined_call_operand.hbm [shape: f32[2,4,256], index: 0, kind: input, shape index: {}]
  %s1 = inlined_call_operand.vmem [shape: f32[2,3,256], index: 1, kind: input, shape index: {}]
  %s2 = inlined_call_operand.vmem [shape: f32[3,7,24], index: 2, kind: input, shape index: {}]
  %s3 = inlined_call_operand.hbm [shape: f32[3,4,24], index: 3, kind: input, shape index: {}]
  %s4 = inlined_call_operand.hbm [shape: f32[2,4,256], index: 4, kind: output, shape index: {0}]
  %s5 = inlined_call_operand.vmem [shape: f32[2,3,256], index: 5, kind: output, shape index: {1}]
  %6 = xla_tuple %s4, %s5
  %s7 = sld [smem:[#allocation0]]
  $region65: #{tpu_custom_call.1} parent=0
    _
  %s9 = ssub.s32 1, %s7
  %s10 = scalar_select 0, %s9, %s7
  $region1: #{tpu_custom_call.1} parent=0
    #allocation4 [shape = 'u8[8192]{0}', space=vmem, size = 0x2000, scoped, tag = 'input window, operand 0']
    #allocation5 [shape = 's32[2]{0}', space=sflag, size = 0x8, scoped, tag = 'scoped memory for tpu_custom_call.1']
    #allocation6 [shape = 's32[2]{0}', space=sflag, size = 0x8, scoped, tag = 'scoped memory for tpu_custom_call.1']
    #allocation7 [shape = 'u8[6144]{0}', space=vmem, size = 0x1800, scoped, tag = 'input window, operand 3, single buffered']
    #allocation8 [shape = 's32[1]{0}', space=sflag, size = 0x4, scoped, tag = 'scoped memory for tpu_custom_call.1']
    #allocation9 [shape = 'u8[8192]{0}', space=vmem, size = 0x2000, scoped, tag = 'output window, operand 0']
    %11 = vsyncpa [#allocation5], 0
    %s12 = scalar_lea.sflag [#allocation5], 1
    %13 = vsyncpa %s12, 0
    %14 = vsyncpa [#allocation8], 0
    %15 = vsyncpa [#allocation6], 0
    %s16 = scalar_lea.sflag [#allocation6], 1
    %17 = vsyncpa %s16, 0
    loop: start=0, step=1, limit=4
    $region2: #{tpu_custom_call.1} parent=1 // loop_pre_header
      _
    $region3: #{tpu_custom_call.1} parent=1 // loop_header
      %s19 = sphi 0, %s23
      %p20 = scmp.ge.s32.totalorder %s19, 4
      %s29 = sphi 0, %s31
      %s32 = sphi 0, %s29
      %s33 = sphi 0, %s32
      %s49 = sphi 0, %s33
      %s55 = sphi 0, %s57
      %s58 = sphi 0, %s55
      %s59 = sphi 0, %s58
      %s75 = sphi 0, %s59
      %s79 = sphi 0, %s79
      %s81 = sphi 0, %s79
      %s82 = sphi 0, %s81
      %s96 = sphi 0, %s82
      %s100 = sphi 0, %s100
      %s102 = sphi 0, %s100
      %s103 = sphi 0, %s102
      %s117 = sphi 0, %s103
      %s123 = sphi 0, %s125
      %s126 = sphi 0, %s123
      %s127 = sphi 0, %s126
      %s143 = sphi 0, %s127
      %s149 = sphi 0, %s151
      %s152 = sphi 0, %s149
      %s153 = sphi 0, %s152
      %s169 = sphi 0, %s153
    $region4: #{tpu_custom_call.1} parent=1 // loop_header_branch
      %22 = sbr.rel (%p20) target = $region8
    $region5: #{tpu_custom_call.1} parent=1 // loop_body
      %s24 = ssub.s32 %s19, 1
      %s25 = ssub.s32 %s19, 2
      %s26 = sadd.s32 %s19, 1
      %s27 = ssub.s32 %s19, %s26
      %p28 = scmp.eq.s32.totalorder %s27, 0
      %s30 = sadd.s32 %s29, 1
      %s31 = scalar_select %p28, %s29, %s30
      %p34 = pneg %p28
      %p35 = scmp.eq.s32.totalorder %s19, 1
      %p36 = por %p34, %p35
      %p37 = scmp.ne.s32.totalorder %s29, %s32
      %p38 = scmp.eq.s32.totalorder %s19, 0
      %p39 = por %p37, %p38
      %p40 = scmp.ne.s32.totalorder %s29, %s32
      %p41 = scmp.eq.s32.totalorder %s24, 1
      %p42 = por %p40, %p41
      %p43 = scmp.ne.s32.totalorder %s32, %s33
      %p44 = scmp.eq.s32.totalorder %s24, 0
      %p45 = por %p43, %p44
      %p46 = scmp.ne.s32.totalorder %s32, %s33
      %p47 = scmp.eq.s32.totalorder %s25, 1
      %p48 = por %p46, %p47
      %p50 = scmp.ne.s32.totalorder %s33, %s49
      %p51 = scmp.eq.s32.totalorder %s25, 0
      %p52 = por %p50, %p51
      %s53 = ssub.s32 %s19, %s26
      %p54 = scmp.eq.s32.totalorder %s53, 0
      %s56 = sadd.s32 %s55, 1
      %s57 = scalar_select %p54, %s55, %s56
      %p60 = pneg %p54
      %p61 = scmp.eq.s32.totalorder %s19, 1
      %p62 = por %p60, %p61
      %p63 = scmp.ne.s32.totalorder %s55, %s58
      %p64 = scmp.eq.s32.totalorder %s19, 0
      %p65 = por %p63, %p64
      %p66 = scmp.ne.s32.totalorder %s55, %s58
      %p67 = scmp.eq.s32.totalorder %s24, 1
      %p68 = por %p66, %p67
      %p69 = scmp.ne.s32.totalorder %s58, %s59
      %p70 = scmp.eq.s32.totalorder %s24, 0
      %p71 = por %p69, %p70
      %p72 = scmp.ne.s32.totalorder %s58, %s59
      %p73 = scmp.eq.s32.totalorder %s25, 1
      %p74 = por %p72, %p73
      %p76 = scmp.ne.s32.totalorder %s59, %s75
      %p77 = scmp.eq.s32.totalorder %s25, 0
      %p78 = por %p76, %p77
      %s80 = sadd.s32 %s79, 1
      %p83 = scmp.eq.s32.totalorder %s19, 1
      %p84 = scmp.ne.s32.totalorder %s79, %s81
      %p85 = scmp.eq.s32.totalorder %s19, 0
      %p86 = por %p84, %p85
      %p87 = scmp.ne.s32.totalorder %s79, %s81
      %p88 = scmp.eq.s32.totalorder %s24, 1
      %p89 = por %p87, %p88
      %p90 = scmp.ne.s32.totalorder %s81, %s82
      %p91 = scmp.eq.s32.totalorder %s24, 0
      %p92 = por %p90, %p91
      %p93 = scmp.ne.s32.totalorder %s81, %s82
      %p94 = scmp.eq.s32.totalorder %s25, 1
      %p95 = por %p93, %p94
      %p97 = scmp.ne.s32.totalorder %s82, %s96
      %p98 = scmp.eq.s32.totalorder %s25, 0
      %p99 = por %p97, %p98
      %s101 = sadd.s32 %s100, 1
      %p104 = scmp.eq.s32.totalorder %s19, 1
      %p105 = scmp.ne.s32.totalorder %s100, %s102
      %p106 = scmp.eq.s32.totalorder %s19, 0
      %p107 = por %p105, %p106
      %p108 = scmp.ne.s32.totalorder %s100, %s102
      %p109 = scmp.eq.s32.totalorder %s24, 1
      %p110 = por %p108, %p109
      %p111 = scmp.ne.s32.totalorder %s102, %s103
      %p112 = scmp.eq.s32.totalorder %s24, 0
      %p113 = por %p111, %p112
      %p114 = scmp.ne.s32.totalorder %s102, %s103
      %p115 = scmp.eq.s32.totalorder %s25, 1
      %p116 = por %p114, %p115
      %p118 = scmp.ne.s32.totalorder %s103, %s117
      %p119 = scmp.eq.s32.totalorder %s25, 0
      %p120 = por %p118, %p119
      %s121 = ssub.s32 %s19, %s26
      %p122 = scmp.eq.s32.totalorder %s121, 0
      %s124 = sadd.s32 %s123, 1
      %s125 = scalar_select %p122, %s123, %s124
      %p128 = pneg %p122
      %p129 = scmp.eq.s32.totalorder %s19, 1
      %p130 = por %p128, %p129
      %p131 = scmp.ne.s32.totalorder %s123, %s126
      %p132 = scmp.eq.s32.totalorder %s19, 0
      %p133 = por %p131, %p132
      %p134 = scmp.ne.s32.totalorder %s123, %s126
      %p135 = scmp.eq.s32.totalorder %s24, 1
      %p136 = por %p134, %p135
      %p137 = scmp.ne.s32.totalorder %s126, %s127
      %p138 = scmp.eq.s32.totalorder %s24, 0
      %p139 = por %p137, %p138
      %p140 = scmp.ne.s32.totalorder %s126, %s127
      %p141 = scmp.eq.s32.totalorder %s25, 1
      %p142 = por %p140, %p141
      %p144 = scmp.ne.s32.totalorder %s127, %s143
      %p145 = scmp.eq.s32.totalorder %s25, 0
      %p146 = por %p144, %p145
      %s147 = ssub.s32 %s19, %s26
      %p148 = scmp.eq.s32.totalorder %s147, 0
      %s150 = sadd.s32 %s149, 1
      %s151 = scalar_select %p148, %s149, %s150
      %p154 = pneg %p148
      %p155 = scmp.eq.s32.totalorder %s19, 1
      %p156 = por %p154, %p155
      %p157 = scmp.ne.s32.totalorder %s149, %s152
      %p158 = scmp.eq.s32.totalorder %s19, 0
      %p159 = por %p157, %p158
      %p160 = scmp.ne.s32.totalorder %s149, %s152
      %p161 = scmp.eq.s32.totalorder %s24, 1
      %p162 = por %p160, %p161
      %p163 = scmp.ne.s32.totalorder %s152, %s153
      %p164 = scmp.eq.s32.totalorder %s24, 0
      %p165 = por %p163, %p164
      %p166 = scmp.ne.s32.totalorder %s152, %s153
      %p167 = scmp.eq.s32.totalorder %s25, 1
      %p168 = por %p166, %p167
      %p170 = scmp.ne.s32.totalorder %s153, %s169
      %p171 = scmp.eq.s32.totalorder %s25, 0
      %p172 = por %p170, %p171
      %p173 = scmp.le.s32.totalorder 1, %s19
      %p174 = scmp.lt.s32.totalorder %s19, 3
      %p175 = pnand %p173, %p174
      %p176 = pneg %p175
      // Predicated region
      $region9: #{tpu_custom_call.1} parent=5 // pred_check
        _
      $region10: #{tpu_custom_call.1} parent=5 // pred_check_branch
        %178 = sbr.rel (%p175) target = $region12
      $region11: #{tpu_custom_call.1} parent=5 // pred_region
        %s179 = ssub.s32 %s19, 1
        // Predicated region
        $region13: #{tpu_custom_call.1} parent=11 // pred_check
          %p180 = pneg %p92
        $region14: #{tpu_custom_call.1} parent=11 // pred_check_branch
          %182 = sbr.rel (%p180) target = $region16
        $region15: #{tpu_custom_call.1} parent=11 // pred_region
          _
        $region16: #{tpu_custom_call.1} parent=11 // pred_fallthru
          _
        // Predicated region
        $region17: #{tpu_custom_call.1} parent=11 // pred_check
          %p183 = pneg %p113
        $region18: #{tpu_custom_call.1} parent=11 // pred_check_branch
          %185 = sbr.rel (%p183) target = $region20
        $region19: #{tpu_custom_call.1} parent=11 // pred_region
          %s187 = ssub.s32 192, 192
          %188 = vsyncadd [#allocation8], %s187
          %s189 = sshll.u32 [#allocation7], 4
          %s190 = int_to_ptr.vmem [resolvable:$true] %s189
          %195 = dma.hbm_to_vmem [thread:$0]  %s3, 192, %s190, [#allocation8], 64, 64, 4
        $region20: #{tpu_custom_call.1} parent=11 // pred_fallthru
          _
      $region12: #{tpu_custom_call.1} parent=5 // pred_fallthru
        _
      %p196 = scmp.lt.s32.totalorder %s19, 2
      // Predicated region
      $region21: #{tpu_custom_call.1} parent=5 // pred_check
        %p197 = pneg %p196
      $region22: #{tpu_custom_call.1} parent=5 // pred_check_branch
        %199 = sbr.rel (%p197) target = $region24
      $region23: #{tpu_custom_call.1} parent=5 // pred_region
        // Predicated region
        $region25: #{tpu_custom_call.1} parent=23 // pred_check
          %p200 = pneg %p39
        $region26: #{tpu_custom_call.1} parent=23 // pred_check_branch
          %202 = sbr.rel (%p200) target = $region28
        $region27: #{tpu_custom_call.1} parent=23 // pred_region
          %s203 = sand.u32 %s29, 1
          %s204 = scalar_lea.sflag [#allocation5], %s203
          %s205 = sand.u32 %s29, 1
          %s206 = smul.addr %s205, 8
          %s207 = scalar_lea.vmem [#allocation4], %s206
          %s209 = ssub.s32 128, 128
          %210 = vsyncadd %s204, %s209
          %s211 = smul.addr %s19, 2
          %s212 = smul.addr %s211, 64
          %s213 = scalar_lea.hbm %s0, %s212
          %s215 = sshll.u32 %s207, 4
          %s216 = int_to_ptr.vmem [resolvable:$true] %s215
          %218 = dma.hbm_to_vmem [thread:$0]  %s213, 128, %s216, %s204
        $region28: #{tpu_custom_call.1} parent=23 // pred_fallthru
          _
        // Predicated region
        $region29: #{tpu_custom_call.1} parent=23 // pred_check
          %p219 = pneg %p65
        $region30: #{tpu_custom_call.1} parent=23 // pred_check_branch
          %221 = sbr.rel (%p219) target = $region32
        $region31: #{tpu_custom_call.1} parent=23 // pred_region
          %p222 = scmp.lt.s32.totalorder %s19, 1
          %s223 = scalar_select %p222, %s19, 1
          %s224 = smul.addr %s223, 2
          %s225 = smul.addr %s224, 4
          %s226 = scalar_lea.vmem %s1, %s225
        $region32: #{tpu_custom_call.1} parent=23 // pred_fallthru
          _
      $region24: #{tpu_custom_call.1} parent=5 // pred_fallthru
        _
      %p227 = scmp.le.s32.totalorder 1, %s19
      %p228 = scmp.lt.s32.totalorder %s19, 3
      %p229 = pnand %p227, %p228
      %p230 = pneg %p229
      // Predicated region
      $region33: #{tpu_custom_call.1} parent=5 // pred_check
        _
      $region34: #{tpu_custom_call.1} parent=5 // pred_check_branch
        %232 = sbr.rel (%p229) target = $region36
      $region35: #{tpu_custom_call.1} parent=5 // pred_region
        %s233 = ssub.s32 %s19, 1
        %s234 = sand.u32 %s32, 1
        %s235 = scalar_lea.sflag [#allocation5], %s234
        %s236 = sand.u32 %s32, 1
        %s237 = smul.addr %s236, 8
        %s238 = scalar_lea.vmem [#allocation4], %s237
        // Predicated region
        $region37: #{tpu_custom_call.1} parent=35 // pred_check
          %p239 = pneg %p45
        $region38: #{tpu_custom_call.1} parent=35 // pred_check_branch
          %241 = sbr.rel (%p239) target = $region40
        $region39: #{tpu_custom_call.1} parent=35 // pred_region
          %242 = dma.done %s235, 128
        $region40: #{tpu_custom_call.1} parent=35 // pred_fallthru
          _
        // Predicated region
        $region41: #{tpu_custom_call.1} parent=35 // pred_check
          %p243 = pneg %p113
        $region42: #{tpu_custom_call.1} parent=35 // pred_check_branch
          %245 = sbr.rel (%p243) target = $region44
        $region43: #{tpu_custom_call.1} parent=35 // pred_region
          %246 = dma.done [#allocation8], 192
        $region44: #{tpu_custom_call.1} parent=35 // pred_fallthru
          _
        %s247 = sand.u32 %s32, 1
        %s248 = scalar_lea.sflag [#allocation5], %s247
        %s249 = sand.u32 %s32, 1
        %s250 = smul.addr %s249, 8
        %s251 = scalar_lea.vmem [#allocation4], %s250
        %p252 = pneg %p45
        %p253 = pneg %p42
        %p254 = scmp.lt.s32.totalorder %s24, 1
        %s255 = scalar_select %p254, %s24, 1
        %s256 = smul.addr %s255, 2
        %s257 = smul.addr %s256, 4
        %s258 = scalar_lea.vmem %s1, %s257
        %p259 = pneg %p71
        %p260 = pneg %p68
        %p261 = pneg %p92
        %p262 = pneg %p89
        %p263 = pneg %p113
        %p264 = pneg %p110
        %p265 = pneg %p139
        %p266 = pneg %p136
        %s267 = sand.u32 %s126, 1
        %s268 = scalar_lea.sflag [#allocation6], %s267
        %s269 = sand.u32 %s126, 1
        %s270 = smul.addr %s269, 8
        %s271 = scalar_lea.vmem [#allocation9], %s270
        %p272 = pneg %p165
        %p273 = pneg %p162
        %p274 = scmp.lt.s32.totalorder %s24, 1
        %s275 = scalar_select %p274, %s24, 1
        %s276 = smul.addr %s275, 2
        %s277 = smul.addr %s276, 4
        %s278 = scalar_lea.vmem %s5, %s277
        %p279 = scmp.lt.s32.totalorder %s24, 1
        %s280 = scalar_select %p279, %s24, 1
        %s281 = smul.addr %s280, 2
        %s282 = smul.addr %s281, 4
        %s283 = scalar_lea.vmem %s1, %s282
        %p284 = scmp.lt.s32.totalorder %s24, 1
        %s285 = scalar_select %p284, %s24, 1
        %s286 = smul.addr %s285, 2
        %s287 = smul.addr %s286, 4
        %s288 = scalar_lea.vmem %s5, %s287
        %289 = vst [vmem:[#allocation2] sm:$0xff] 0.0
        %290 = vst [vmem:[#allocation2 + $0x18] sm:$0xff] 0.0
        %291 = vst [vmem:[#allocation2 + $0x8] sm:$0xf0] 0.0
        %292 = vst [vmem:[#allocation2 + $0x10] sm:$0xf0] 0.0
        %v293 = vld [vmem:[%s238] sm:$0xff]
        %v295 = vcombine.high %v293, %v293
        %297 = vst [vmem:[#allocation2 + $0x8] sm:$0xf] %v293
        %298 = vst [vmem:[#allocation2 + $0x10] sm:$0xf] %v295
        %v299 = vlaneseq
        %v300 = vand.u32 %v299, 127
        %v301 = vadd.s32 %v300, 128
        %vm302 = vcmp.lt.s32.totalorder %v300, 0
        %v303 = vsub.s32 0, %v300
        %v304 = vsel %vm302, %v303, %v300
        %v305 = vshrl.u32 %v304, 4
        %v306 = vand.u32 %v304, 15
        %v307 = vsub.s32 0, %v306
        %v308 = vsel %vm302, %v307, %v306
        %vm309 = vcmp.lt.s32.totalorder %v301, 0
        %v310 = vsub.s32 0, %v301
        %v311 = vsel %vm309, %v310, %v301
        %v312 = vshrl.u32 %v311, 4
        %v313 = vand.u32 %v311, 15
        %v314 = vsub.s32 0, %v313
        %v315 = vsel %vm309, %v314, %v313
        %vm316 = vcmp.ne.s32.totalorder %v308, 0
        %vm317 = vcmp.ne.s32.totalorder %v315, 0
        %vm318 = vcmp.lt.s32.totalorder %v308, 0
        %vm319 = vcmp.lt.s32.totalorder %v315, 0
        %vm320 = vmand %vm318, %vm316
        %vm321 = vmand %vm319, %vm317
        %v322 = vadd.s32 %v308, 16
        %v323 = vadd.s32 %v315, 16
        %v324 = vsel %vm320, %v322, %v308
        %v325 = vsel %vm321, %v323, %v315
        %vm326 = vcmp.ge.s32.totalorder %v324, 1
        %vm327 = vcmp.ge.s32.totalorder %v325, 1
        %vm328 = vcmp.lt.s32.totalorder %v324, 17
        %vm329 = vcmp.lt.s32.totalorder %v325, 17
        %vm330 = vmand %vm326, %vm328
        %vm331 = vmand %vm327, %vm329
        %vm332 = vcmp.ge.s32.totalorder %v324, 4294967295
        %vm333 = vcmp.ge.s32.totalorder %v325, 4294967295
        %vm334 = vcmp.lt.s32.totalorder %v324, 15
        %vm335 = vcmp.lt.s32.totalorder %v325, 15
        %vm336 = vmand %vm332, %vm334
        %vm337 = vmand %vm333, %vm335
        %v338 = vld [vmem:[#allocation2] sm:$0xff]
        %v339 = vld [vmem:[#allocation2 + $0x8] sm:$0xff]
        %v340 = vld [vmem:[#allocation2 + $0x10] sm:$0xff]
        %v341 = vld [vmem:[#allocation2 + $0x8] sm:$0xff]
        %v342 = vld [vmem:[#allocation2 + $0x10] sm:$0xff]
        %v343 = vld [vmem:[#allocation2 + $0x18] sm:$0xff]
        %347 = vrot.lane.b32.xlu0 %v338, 112
        %v348 = vpop.permute.xlu0 %347
        %349 = vrot.lane.b32.xlu0 %v339, 112
        %v350 = vpop.permute.xlu0 %349
        %351 = vrot.lane.b32.xlu0 %v340, 112
        %v352 = vpop.permute.xlu0 %351
        %vm353 = vcmask 916480
        %v354 = vsel %vm353, %v348, %v350
        %v355 = vsel %vm353, %v350, %v352
        %359 = vrot.lane.b32.xlu0 %v341, 96
        %v360 = vpop.permute.xlu0 %359
        %361 = vrot.lane.b32.xlu0 %v342, 96
        %v362 = vpop.permute.xlu0 %361
        %363 = vrot.lane.b32.xlu0 %v343, 96
        %v364 = vpop.permute.xlu0 %363
        %vm365 = vcmask 785408
        %v366 = vsel %vm365, %v360, %v362
        %v367 = vsel %vm365, %v362, %v364
        %v368 = vsel %vm330, 1, 0
        %v369 = vsel %vm331, 1, 0
        %vm370 = vcmp.eq.s32.totalorder %v368, 1
        %vm371 = vcmp.eq.s32.totalorder %v369, 1
        %372 = vrot.lane.b32.xlu0 %v338, 17
        %v373 = vpop.permute.xlu0 %372
        %374 = vrot.lane.b32.xlu0 %v339, 17
        %v375 = vpop.permute.xlu0 %374
        %376 = vrot.lane.b32.xlu0 %v340, 17
        %v377 = vpop.permute.xlu0 %376
        %378 = vrot.lane.b32.xlu0 %v354, 17
        %v379 = vpop.permute.xlu0 %378
        %380 = vrot.lane.b32.xlu0 %v355, 17
        %v381 = vpop.permute.xlu0 %380
        %382 = vrot.lane.b32.xlu0 %v352, 17
        %v383 = vpop.permute.xlu0 %382
        %384 = vrot.lane.b32.xlu0 %v360, 17
        %v385 = vpop.permute.xlu0 %384
        %386 = vrot.lane.b32.xlu0 %v366, 17
        %v387 = vpop.permute.xlu0 %386
        %388 = vrot.lane.b32.xlu0 %v367, 17
        %v389 = vpop.permute.xlu0 %388
        %vm390 = vcmask 138240
        %v391 = vsel %vm390, %v373, %v375
        %v392 = vsel %vm390, %v375, %v377
        %v393 = vsel %vm390, %v379, %v381
        %v394 = vsel %vm390, %v381, %v383
        %v395 = vsel %vm390, %v385, %v387
        %v396 = vsel %vm390, %v387, %v389
        %v403 = vsel %vm370, %v391, 0.0
        %v404 = vsel %vm371, %v392, 0.0
        %v405 = vsel %vm370, %v393, 0.0
        %v406 = vsel %vm371, %v394, 0.0
        %v407 = vsel %vm370, %v395, 0.0
        %v408 = vsel %vm371, %v396, 0.0
        %v409 = vld [vmem:[%s2] sm:$0x7f]
        %s410 = scalar_lea.vmem %s2, 8
        %v411 = vld [vmem:[%s410] sm:$0x7f]
        %412 = vrot.lane.b32.xlu0 %v338, 16
        %v413 = vpop.permute.xlu0 %412
        %414 = vrot.lane.b32.xlu0 %v339, 16
        %v415 = vpop.permute.xlu0 %414
        %416 = vrot.lane.b32.xlu0 %v340, 16
        %v417 = vpop.permute.xlu0 %416
        %418 = vrot.lane.b32.xlu0 %v350, 16
        %v419 = vpop.permute.xlu0 %418
        %420 = vrot.lane.b32.xlu0 %v355, 16
        %v421 = vpop.permute.xlu0 %420
        %422 = vrot.lane.b32.xlu0 %v352, 16
        %v423 = vpop.permute.xlu0 %422
        %424 = vrot.lane.b32.xlu0 %v360, 16
        %v425 = vpop.permute.xlu0 %424
        %426 = vrot.lane.b32.xlu0 %v366, 16
        %v427 = vpop.permute.xlu0 %426
        %428 = vrot.lane.b32.xlu0 %v367, 16
        %v429 = vpop.permute.xlu0 %428
        %vm430 = vcmask 130048
        %v431 = vsel %vm430, %v413, %v415
        %v432 = vsel %vm430, %v415, %v417
        %v433 = vsel %vm430, %v419, %v421
        %v434 = vsel %vm430, %v421, %v423
        %v435 = vsel %vm430, %v425, %v427
        %v436 = vsel %vm430, %v427, %v429
        %vm443 = vcmask 195584
        %v445 = vsel %vm443, %v411, 0
        %447 = vmatprep.subr.mxu0 0.0
        %448 = vmatpush1.msra.mxu0 0.0
        %449 = vmatprep.subr.mxu0 0.0
        %450 = vmatpush1.msra.mxu0 0.0
        %451 = vmatprep.subr.mxu0 0.0
        %452 = vmatpush1.msra.mxu0 0.0
        %453 = vmatprep.subr.mxu0 0.0
        %454 = vmatpush1.msra.mxu0 0.0
        %455 = vmatprep.subr.mxu0 0.0
        %456 = vmatpush1.msra.mxu0 0.0
        %457 = vmatprep.subr.mxu0 0.0
        %458 = vmatpush1.msra.mxu0 0.0
        %459 = vmatprep.subr.mxu0 0.0
        %460 = vmatpush1.msra.mxu0 0.0
        %461 = vmatprep.subr.mxu0 0.0
        %462 = vmatpush1.msra.mxu0 0.0
        %463 = vmatprep.subr.mxu0 0.0
        %464 = vmatpush1.msra.mxu0 0.0
        %465 = vmatprep.subr.mxu0 0.0
        %466 = vmatpush1.msra.mxu0 0.0
        %467 = vmatprep.subr.mxu0 0.0
        %468 = vmatpush1.msra.mxu0 0.0
        %469 = vmatprep.subr.mxu0 0.0
        %470 = vmatpush1.msra.mxu0 0.0
        %471 = vmatprep.subr.mxu0 0.0
        %472 = vmatpush1.msra.mxu0 0.0
        %473 = vmatprep.subr.mxu0 %v436
        %474 = vmatpush1.msra.mxu0 %v435
        %475 = vmatprep.subr.mxu0 %v434
        %476 = vmatpush1.msra.mxu0 %v433
        %477 = vmatprep.subr.mxu0 %v432
        %478 = vmatpush1.msra.mxu0 %v431
        %479 = vmatprep.subr.mxu0 0.0
        %480 = vmatpush2.msra.mxu0 0.0
        %481 = vmatprep.subr.mxu0 0.0
        %482 = vmatpush2.msra.mxu0 0.0
        %483 = vmatprep.subr.mxu0 0.0
        %484 = vmatpush2.msra.mxu0 0.0
        %485 = vmatprep.subr.mxu0 0.0
        %486 = vmatpush2.msra.mxu0 0.0
        %487 = vmatprep.subr.mxu0 0.0
        %488 = vmatpush2.msra.mxu0 0.0
        %489 = vmatprep.subr.mxu0 0.0
        %490 = vmatpush2.msra.mxu0 0.0
        %491 = vmatprep.subr.mxu0 0.0
        %492 = vmatpush2.msra.mxu0 0.0
        %493 = vmatprep.subr.mxu0 0.0
        %494 = vmatpush2.msra.mxu0 0.0
        %495 = vmatprep.subr.mxu0 0.0
        %496 = vmatpush2.msra.mxu0 0.0
        %497 = vmatprep.subr.mxu0 0.0
        %498 = vmatpush2.msra.mxu0 0.0
        %499 = vmatprep.subr.mxu0 0.0
        %500 = vmatpush2.msra.mxu0 0.0
        %501 = vmatprep.subr.mxu0 0.0
        %502 = vmatpush2.msra.mxu0 0.0
        %503 = vmatprep.subr.mxu0 0.0
        %504 = vmatpush2.msra.mxu0 0.0
        %505 = vmatprep.subr.mxu0 0.0
        %506 = vmatpush2.msra.mxu0 0.0
        %507 = vmatprep.subr.mxu0 0.0
        %508 = vmatpush2.msra.mxu0 0.0
        %509 = vmatprep.subr.mxu0 0.0
        %510 = vmatpush2.msra.mxu0 0.0
        %511 = vmatprep.mubr.f32.mxu0 0.0
        %512 = vmatmul.mubr.f32.gmra.mxu0 %v445
        %v513 = vpop.f32.mrf.mxu0
        %v514 = vadd.f32 0.0, %v513
        %v515 = vpop.f32.mrf.mxu0
        %v516 = vadd.f32 0.0, %v515
        %517 = vdwg.mxu0
        %v519 = vsel %vm443, %v409, 0
        %521 = vmatprep.subr.mxu0 0.0
        %522 = vmatpush1.msra.mxu0 0.0
        %523 = vmatprep.subr.mxu0 0.0
        %524 = vmatpush1.msra.mxu0 0.0
        %525 = vmatprep.subr.mxu0 0.0
        %526 = vmatpush1.msra.mxu0 0.0
        %527 = vmatprep.subr.mxu0 0.0
        %528 = vmatpush1.msra.mxu0 0.0
        %529 = vmatprep.subr.mxu0 0.0
        %530 = vmatpush1.msra.mxu0 0.0
        %531 = vmatprep.subr.mxu0 0.0
        %532 = vmatpush1.msra.mxu0 0.0
        %533 = vmatprep.subr.mxu0 0.0
        %534 = vmatpush1.msra.mxu0 0.0
        %535 = vmatprep.subr.mxu0 0.0
        %536 = vmatpush1.msra.mxu0 0.0
        %537 = vmatprep.subr.mxu0 0.0
        %538 = vmatpush1.msra.mxu0 0.0
        %539 = vmatprep.subr.mxu0 0.0
        %540 = vmatpush1.msra.mxu0 0.0
        %541 = vmatprep.subr.mxu0 0.0
        %542 = vmatpush1.msra.mxu0 0.0
        %543 = vmatprep.subr.mxu0 0.0
        %544 = vmatpush1.msra.mxu0 0.0
        %545 = vmatprep.subr.mxu0 0.0
        %546 = vmatpush1.msra.mxu0 0.0
        %547 = vmatprep.subr.mxu0 %v408
        %548 = vmatpush1.msra.mxu0 %v407
        %549 = vmatprep.subr.mxu0 %v406
        %550 = vmatpush1.msra.mxu0 %v405
        %551 = vmatprep.subr.mxu0 %v404
        %552 = vmatpush1.msra.mxu0 %v403
        %553 = vmatprep.subr.mxu0 0.0
        %554 = vmatpush2.msra.mxu0 0.0
        %555 = vmatprep.subr.mxu0 0.0
        %556 = vmatpush2.msra.mxu0 0.0
        %557 = vmatprep.subr.mxu0 0.0
        %558 = vmatpush2.msra.mxu0 0.0
        %559 = vmatprep.subr.mxu0 0.0
        %560 = vmatpush2.msra.mxu0 0.0
        %561 = vmatprep.subr.mxu0 0.0
        %562 = vmatpush2.msra.mxu0 0.0
        %563 = vmatprep.subr.mxu0 0.0
        %564 = vmatpush2.msra.mxu0 0.0
        %565 = vmatprep.subr.mxu0 0.0
        %566 = vmatpush2.msra.mxu0 0.0
        %567 = vmatprep.subr.mxu0 0.0
        %568 = vmatpush2.msra.mxu0 0.0
        %569 = vmatprep.subr.mxu0 0.0
        %570 = vmatpush2.msra.mxu0 0.0
        %571 = vmatprep.subr.mxu0 0.0
        %572 = vmatpush2.msra.mxu0 0.0
        %573 = vmatprep.subr.mxu0 0.0
        %574 = vmatpush2.msra.mxu0 0.0
        %575 = vmatprep.subr.mxu0 0.0
        %576 = vmatpush2.msra.mxu0 0.0
        %577 = vmatprep.subr.mxu0 0.0
        %578 = vmatpush2.msra.mxu0 0.0
        %579 = vmatprep.subr.mxu0 0.0
        %580 = vmatpush2.msra.mxu0 0.0
        %581 = vmatprep.subr.mxu0 0.0
        %582 = vmatpush2.msra.mxu0 0.0
        %583 = vmatprep.subr.mxu0 0.0
        %584 = vmatpush2.msra.mxu0 0.0
        %585 = vmatprep.mubr.f32.mxu0 0.0
        %586 = vmatmul.mubr.f32.gmra.mxu0 %v519
        %v587 = vpop.f32.mrf.mxu0
        %v588 = vadd.f32 %v514, %v587
        %v589 = vpop.f32.mrf.mxu0
        %v590 = vadd.f32 %v516, %v589
        %591 = vdwg.mxu0
        %592 = vrot.lane.b32.xlu0 %v341, 112
        %v593 = vpop.permute.xlu0 %592
        %594 = vrot.lane.b32.xlu0 %v342, 112
        %v595 = vpop.permute.xlu0 %594
        %596 = vrot.lane.b32.xlu0 %v343, 112
        %v597 = vpop.permute.xlu0 %596
        %v598 = vsel %vm353, %v593, %v595
        %v599 = vsel %vm353, %v595, %v597
        %v600 = vsel %vm336, 1, 0
        %v601 = vsel %vm337, 1, 0
        %vm602 = vcmp.eq.s32.totalorder %v600, 1
        %vm603 = vcmp.eq.s32.totalorder %v601, 1
        %604 = vrot.lane.b32.xlu0 %v338, 15
        %v605 = vpop.permute.xlu0 %604
        %606 = vrot.lane.b32.xlu0 %v339, 15
        %v607 = vpop.permute.xlu0 %606
        %608 = vrot.lane.b32.xlu0 %v340, 15
        %v609 = vpop.permute.xlu0 %608
        %610 = vrot.lane.b32.xlu0 %v593, 15
        %v611 = vpop.permute.xlu0 %610
        %612 = vrot.lane.b32.xlu0 %v598, 15
        %v613 = vpop.permute.xlu0 %612
        %614 = vrot.lane.b32.xlu0 %v599, 15
        %v615 = vpop.permute.xlu0 %614
        %616 = vrot.lane.b32.xlu0 %v360, 15
        %v617 = vpop.permute.xlu0 %616
        %618 = vrot.lane.b32.xlu0 %v366, 15
        %v619 = vpop.permute.xlu0 %618
        %620 = vrot.lane.b32.xlu0 %v367, 15
        %v621 = vpop.permute.xlu0 %620
        %vm622 = vcmask 121856
        %v623 = vsel %vm622, %v605, %v607
        %v624 = vsel %vm622, %v607, %v609
        %v625 = vsel %vm622, %v611, %v613
        %v626 = vsel %vm622, %v613, %v615
        %v627 = vsel %vm622, %v617, %v619
        %v628 = vsel %vm622, %v619, %v621
        %v635 = vsel %vm602, %v623, 0.0
        %v636 = vsel %vm603, %v624, 0.0
        %v637 = vsel %vm602, %v625, 0.0
        %v638 = vsel %vm603, %v626, 0.0
        %v639 = vsel %vm602, %v627, 0.0
        %v640 = vsel %vm603, %v628, 0.0
        %s641 = scalar_lea.vmem %s2, 16
        %v642 = vld [vmem:[%s641] sm:$0x7f]
        %v644 = vsel %vm443, %v642, 0
        %646 = vmatprep.subr.mxu0 0.0
        %647 = vmatpush1.msra.mxu0 0.0
        %648 = vmatprep.subr.mxu0 0.0
        %649 = vmatpush1.msra.mxu0 0.0
        %650 = vmatprep.subr.mxu0 0.0
        %651 = vmatpush1.msra.mxu0 0.0
        %652 = vmatprep.subr.mxu0 0.0
        %653 = vmatpush1.msra.mxu0 0.0
        %654 = vmatprep.subr.mxu0 0.0
        %655 = vmatpush1.msra.mxu0 0.0
        %656 = vmatprep.subr.mxu0 0.0
        %657 = vmatpush1.msra.mxu0 0.0
        %658 = vmatprep.subr.mxu0 0.0
        %659 = vmatpush1.msra.mxu0 0.0
        %660 = vmatprep.subr.mxu0 0.0
        %661 = vmatpush1.msra.mxu0 0.0
        %662 = vmatprep.subr.mxu0 0.0
        %663 = vmatpush1.msra.mxu0 0.0
        %664 = vmatprep.subr.mxu0 0.0
        %665 = vmatpush1.msra.mxu0 0.0
        %666 = vmatprep.subr.mxu0 0.0
        %667 = vmatpush1.msra.mxu0 0.0
        %668 = vmatprep.subr.mxu0 0.0
        %669 = vmatpush1.msra.mxu0 0.0
        %670 = vmatprep.subr.mxu0 0.0
        %671 = vmatpush1.msra.mxu0 0.0
        %672 = vmatprep.subr.mxu0 %v640
        %673 = vmatpush1.msra.mxu0 %v639
        %674 = vmatprep.subr.mxu0 %v638
        %675 = vmatpush1.msra.mxu0 %v637
        %676 = vmatprep.subr.mxu0 %v636
        %677 = vmatpush1.msra.mxu0 %v635
        %678 = vmatprep.subr.mxu0 0.0
        %679 = vmatpush2.msra.mxu0 0.0
        %680 = vmatprep.subr.mxu0 0.0
        %681 = vmatpush2.msra.mxu0 0.0
        %682 = vmatprep.subr.mxu0 0.0
        %683 = vmatpush2.msra.mxu0 0.0
        %684 = vmatprep.subr.mxu0 0.0
        %685 = vmatpush2.msra.mxu0 0.0
        %686 = vmatprep.subr.mxu0 0.0
        %687 = vmatpush2.msra.mxu0 0.0
        %688 = vmatprep.subr.mxu0 0.0
        %689 = vmatpush2.msra.mxu0 0.0
        %690 = vmatprep.subr.mxu0 0.0
        %691 = vmatpush2.msra.mxu0 0.0
        %692 = vmatprep.subr.mxu0 0.0
        %693 = vmatpush2.msra.mxu0 0.0
        %694 = vmatprep.subr.mxu0 0.0
        %695 = vmatpush2.msra.mxu0 0.0
        %696 = vmatprep.subr.mxu0 0.0
        %697 = vmatpush2.msra.mxu0 0.0
        %698 = vmatprep.subr.mxu0 0.0
        %699 = vmatpush2.msra.mxu0 0.0
        %700 = vmatprep.subr.mxu0 0.0
        %701 = vmatpush2.msra.mxu0 0.0
        %702 = vmatprep.subr.mxu0 0.0
        %703 = vmatpush2.msra.mxu0 0.0
        %704 = vmatprep.subr.mxu0 0.0
        %705 = vmatpush2.msra.mxu0 0.0
        %706 = vmatprep.subr.mxu0 0.0
        %707 = vmatpush2.msra.mxu0 0.0
        %708 = vmatprep.subr.mxu0 0.0
        %709 = vmatpush2.msra.mxu0 0.0
        %710 = vmatprep.mubr.f32.mxu0 0.0
        %711 = vmatmul.mubr.f32.gmra.mxu0 %v644
        %v712 = vpop.f32.mrf.mxu0
        %v713 = vadd.f32 0.0, %v712
        %v714 = vpop.f32.mrf.mxu0
        %v715 = vadd.f32 0.0, %v714
        %716 = vdwg.mxu0
        %v717 = vadd.f32 %v588, %v713
        %v718 = vadd.f32 %v590, %v715
        %v719 = vld [vmem:[%s283] sm:$0x77]
        %v721 = vcombine.low %v719, %v719
        %v723 = vadd.f32 %v717, %v721
        %v724 = vadd.f32 %v718, %v719
        %v727 = vcombine.high %v723, %v724
        %729 = vst [vmem:[%s288] sm:$0x77] %v727
        %730 = vst [vmem:[#allocation3] sm:$0xff] 0.0
        %731 = vst [vmem:[#allocation3 + $0x18] sm:$0xff] 0.0
        %732 = vst [vmem:[#allocation3 + $0x8] sm:$0xf8] 0.0
        %733 = vst [vmem:[#allocation3 + $0x10] sm:$0xf8] 0.0
        %v734 = vrot.slane %v723, 4
        %v735 = vrot.slane %v724, 4
        %738 = vst [vmem:[#allocation3 + $0x8] sm:$0x7] %v734
        %739 = vst [vmem:[#allocation3 + $0x10] sm:$0x7] %v735
        %v740 = vld [vmem:[#allocation3] sm:$0xff]
        %v741 = vld [vmem:[#allocation3 + $0x8] sm:$0xff]
        %v742 = vld [vmem:[#allocation3 + $0x10] sm:$0xff]
        %v743 = vld [vmem:[#allocation3 + $0x8] sm:$0xff]
        %v744 = vld [vmem:[#allocation3 + $0x10] sm:$0xff]
        %v745 = vld [vmem:[#allocation3 + $0x18] sm:$0xff]
        %749 = vrot.lane.b32.xlu0 %v740, 112
        %v750 = vpop.permute.xlu0 %749
        %751 = vrot.lane.b32.xlu0 %v741, 112
        %v752 = vpop.permute.xlu0 %751
        %753 = vrot.lane.b32.xlu0 %v742, 112
        %v754 = vpop.permute.xlu0 %753
        %v755 = vsel %vm353, %v750, %v752
        %v756 = vsel %vm353, %v752, %v754
        %760 = vrot.lane.b32.xlu0 %v743, 96
        %v761 = vpop.permute.xlu0 %760
        %762 = vrot.lane.b32.xlu0 %v744, 96
        %v763 = vpop.permute.xlu0 %762
        %764 = vrot.lane.b32.xlu0 %v745, 96
        %v765 = vpop.permute.xlu0 %764
        %v766 = vsel %vm365, %v761, %v763
        %v767 = vsel %vm365, %v763, %v765
        %768 = vrot.lane.b32.xlu0 %v740, 17
        %v769 = vpop.permute.xlu0 %768
        %770 = vrot.lane.b32.xlu0 %v741, 17
        %v771 = vpop.permute.xlu0 %770
        %772 = vrot.lane.b32.xlu0 %v742, 17
        %v773 = vpop.permute.xlu0 %772
        %774 = vrot.lane.b32.xlu0 %v755, 17
        %v775 = vpop.permute.xlu0 %774
        %776 = vrot.lane.b32.xlu0 %v756, 17
        %v777 = vpop.permute.xlu0 %776
        %778 = vrot.lane.b32.xlu0 %v754, 17
        %v779 = vpop.permute.xlu0 %778
        %780 = vrot.lane.b32.xlu0 %v761, 17
        %v781 = vpop.permute.xlu0 %780
        %782 = vrot.lane.b32.xlu0 %v766, 17
        %v783 = vpop.permute.xlu0 %782
        %784 = vrot.lane.b32.xlu0 %v767, 17
        %v785 = vpop.permute.xlu0 %784
        %v786 = vsel %vm390, %v769, %v771
        %v787 = vsel %vm390, %v771, %v773
        %v788 = vsel %vm390, %v775, %v777
        %v789 = vsel %vm390, %v777, %v779
        %v790 = vsel %vm390, %v781, %v783
        %v791 = vsel %vm390, %v783, %v785
        %v798 = vsel %vm370, %v786, 0.0
        %v799 = vsel %vm371, %v787, 0.0
        %v800 = vsel %vm370, %v788, 0.0
        %v801 = vsel %vm371, %v789, 0.0
        %v802 = vsel %vm370, %v790, 0.0
        %v803 = vsel %vm371, %v791, 0.0
        %v804 = vld [vmem:[#allocation7] sm:$0xf]
        %s805 = scalar_lea.vmem [#allocation7], 4
        %v806 = vld [vmem:[%s805] sm:$0xf]
        %807 = vrot.lane.b32.xlu0 %v740, 16
        %v808 = vpop.permute.xlu0 %807
        %809 = vrot.lane.b32.xlu0 %v741, 16
        %v810 = vpop.permute.xlu0 %809
        %811 = vrot.lane.b32.xlu0 %v742, 16
        %v812 = vpop.permute.xlu0 %811
        %813 = vrot.lane.b32.xlu0 %v752, 16
        %v814 = vpop.permute.xlu0 %813
        %815 = vrot.lane.b32.xlu0 %v756, 16
        %v816 = vpop.permute.xlu0 %815
        %817 = vrot.lane.b32.xlu0 %v754, 16
        %v818 = vpop.permute.xlu0 %817
        %819 = vrot.lane.b32.xlu0 %v761, 16
        %v820 = vpop.permute.xlu0 %819
        %821 = vrot.lane.b32.xlu0 %v766, 16
        %v822 = vpop.permute.xlu0 %821
        %823 = vrot.lane.b32.xlu0 %v767, 16
        %v824 = vpop.permute.xlu0 %823
        %v825 = vsel %vm430, %v808, %v810
        %v826 = vsel %vm430, %v810, %v812
        %v827 = vsel %vm430, %v814, %v816
        %v828 = vsel %vm430, %v816, %v818
        %v829 = vsel %vm430, %v820, %v822
        %v830 = vsel %vm430, %v822, %v824
        %v838 = vsel %vm443, %v806, 0
        %840 = vmatprep.subr.mxu0 0.0
        %841 = vmatpush1.msra.mxu0 0.0
        %842 = vmatprep.subr.mxu0 0.0
        %843 = vmatpush1.msra.mxu0 0.0
        %844 = vmatprep.subr.mxu0 0.0
        %845 = vmatpush1.msra.mxu0 0.0
        %846 = vmatprep.subr.mxu0 0.0
        %847 = vmatpush1.msra.mxu0 0.0
        %848 = vmatprep.subr.mxu0 0.0
        %849 = vmatpush1.msra.mxu0 0.0
        %850 = vmatprep.subr.mxu0 0.0
        %851 = vmatpush1.msra.mxu0 0.0
        %852 = vmatprep.subr.mxu0 0.0
        %853 = vmatpush1.msra.mxu0 0.0
        %854 = vmatprep.subr.mxu0 0.0
        %855 = vmatpush1.msra.mxu0 0.0
        %856 = vmatprep.subr.mxu0 0.0
        %857 = vmatpush1.msra.mxu0 0.0
        %858 = vmatprep.subr.mxu0 0.0
        %859 = vmatpush1.msra.mxu0 0.0
        %860 = vmatprep.subr.mxu0 0.0
        %861 = vmatpush1.msra.mxu0 0.0
        %862 = vmatprep.subr.mxu0 0.0
        %863 = vmatpush1.msra.mxu0 0.0
        %864 = vmatprep.subr.mxu0 0.0
        %865 = vmatpush1.msra.mxu0 0.0
        %866 = vmatprep.subr.mxu0 %v830
        %867 = vmatpush1.msra.mxu0 %v829
        %868 = vmatprep.subr.mxu0 %v828
        %869 = vmatpush1.msra.mxu0 %v827
        %870 = vmatprep.subr.mxu0 %v826
        %871 = vmatpush1.msra.mxu0 %v825
        %872 = vmatprep.subr.mxu0 0.0
        %873 = vmatpush2.msra.mxu0 0.0
        %874 = vmatprep.subr.mxu0 0.0
        %875 = vmatpush2.msra.mxu0 0.0
        %876 = vmatprep.subr.mxu0 0.0
        %877 = vmatpush2.msra.mxu0 0.0
        %878 = vmatprep.subr.mxu0 0.0
        %879 = vmatpush2.msra.mxu0 0.0
        %880 = vmatprep.subr.mxu0 0.0
        %881 = vmatpush2.msra.mxu0 0.0
        %882 = vmatprep.subr.mxu0 0.0
        %883 = vmatpush2.msra.mxu0 0.0
        %884 = vmatprep.subr.mxu0 0.0
        %885 = vmatpush2.msra.mxu0 0.0
        %886 = vmatprep.subr.mxu0 0.0
        %887 = vmatpush2.msra.mxu0 0.0
        %888 = vmatprep.subr.mxu0 0.0
        %889 = vmatpush2.msra.mxu0 0.0
        %890 = vmatprep.subr.mxu0 0.0
        %891 = vmatpush2.msra.mxu0 0.0
        %892 = vmatprep.subr.mxu0 0.0
        %893 = vmatpush2.msra.mxu0 0.0
        %894 = vmatprep.subr.mxu0 0.0
        %895 = vmatpush2.msra.mxu0 0.0
        %896 = vmatprep.subr.mxu0 0.0
        %897 = vmatpush2.msra.mxu0 0.0
        %898 = vmatprep.subr.mxu0 0.0
        %899 = vmatpush2.msra.mxu0 0.0
        %900 = vmatprep.subr.mxu0 0.0
        %901 = vmatpush2.msra.mxu0 0.0
        %902 = vmatprep.subr.mxu0 0.0
        %903 = vmatpush2.msra.mxu0 0.0
        %904 = vmatprep.mubr.f32.mxu0 0.0
        %905 = vmatmul.mubr.f32.gmra.mxu0 %v838
        %v906 = vpop.f32.mrf.mxu0
        %v907 = vadd.f32 0.0, %v906
        %v908 = vpop.f32.mrf.mxu0
        %v909 = vadd.f32 0.0, %v908
        %910 = vdwg.mxu0
        %v912 = vsel %vm443, %v804, 0
        %914 = vmatprep.subr.mxu0 0.0
        %915 = vmatpush1.msra.mxu0 0.0
        %916 = vmatprep.subr.mxu0 0.0
        %917 = vmatpush1.msra.mxu0 0.0
        %918 = vmatprep.subr.mxu0 0.0
        %919 = vmatpush1.msra.mxu0 0.0
        %920 = vmatprep.subr.mxu0 0.0
        %921 = vmatpush1.msra.mxu0 0.0
        %922 = vmatprep.subr.mxu0 0.0
        %923 = vmatpush1.msra.mxu0 0.0
        %924 = vmatprep.subr.mxu0 0.0
        %925 = vmatpush1.msra.mxu0 0.0
        %926 = vmatprep.subr.mxu0 0.0
        %927 = vmatpush1.msra.mxu0 0.0
        %928 = vmatprep.subr.mxu0 0.0
        %929 = vmatpush1.msra.mxu0 0.0
        %930 = vmatprep.subr.mxu0 0.0
        %931 = vmatpush1.msra.mxu0 0.0
        %932 = vmatprep.subr.mxu0 0.0
        %933 = vmatpush1.msra.mxu0 0.0
        %934 = vmatprep.subr.mxu0 0.0
        %935 = vmatpush1.msra.mxu0 0.0
        %936 = vmatprep.subr.mxu0 0.0
        %937 = vmatpush1.msra.mxu0 0.0
        %938 = vmatprep.subr.mxu0 0.0
        %939 = vmatpush1.msra.mxu0 0.0
        %940 = vmatprep.subr.mxu0 %v803
        %941 = vmatpush1.msra.mxu0 %v802
        %942 = vmatprep.subr.mxu0 %v801
        %943 = vmatpush1.msra.mxu0 %v800
        %944 = vmatprep.subr.mxu0 %v799
        %945 = vmatpush1.msra.mxu0 %v798
        %946 = vmatprep.subr.mxu0 0.0
        %947 = vmatpush2.msra.mxu0 0.0
        %948 = vmatprep.subr.mxu0 0.0
        %949 = vmatpush2.msra.mxu0 0.0
        %950 = vmatprep.subr.mxu0 0.0
        %951 = vmatpush2.msra.mxu0 0.0
        %952 = vmatprep.subr.mxu0 0.0
        %953 = vmatpush2.msra.mxu0 0.0
        %954 = vmatprep.subr.mxu0 0.0
        %955 = vmatpush2.msra.mxu0 0.0
        %956 = vmatprep.subr.mxu0 0.0
        %957 = vmatpush2.msra.mxu0 0.0
        %958 = vmatprep.subr.mxu0 0.0
        %959 = vmatpush2.msra.mxu0 0.0
        %960 = vmatprep.subr.mxu0 0.0
        %961 = vmatpush2.msra.mxu0 0.0
        %962 = vmatprep.subr.mxu0 0.0
        %963 = vmatpush2.msra.mxu0 0.0
        %964 = vmatprep.subr.mxu0 0.0
        %965 = vmatpush2.msra.mxu0 0.0
        %966 = vmatprep.subr.mxu0 0.0
        %967 = vmatpush2.msra.mxu0 0.0
        %968 = vmatprep.subr.mxu0 0.0
        %969 = vmatpush2.msra.mxu0 0.0
        %970 = vmatprep.subr.mxu0 0.0
        %971 = vmatpush2.msra.mxu0 0.0
        %972 = vmatprep.subr.mxu0 0.0
        %973 = vmatpush2.msra.mxu0 0.0
        %974 = vmatprep.subr.mxu0 0.0
        %975 = vmatpush2.msra.mxu0 0.0
        %976 = vmatprep.subr.mxu0 0.0
        %977 = vmatpush2.msra.mxu0 0.0
        %978 = vmatprep.mubr.f32.mxu0 0.0
        %979 = vmatmul.mubr.f32.gmra.mxu0 %v912
        %v980 = vpop.f32.mrf.mxu0
        %v981 = vadd.f32 %v907, %v980
        %v982 = vpop.f32.mrf.mxu0
        %v983 = vadd.f32 %v909, %v982
        %984 = vdwg.mxu0
        %985 = vrot.lane.b32.xlu0 %v743, 112
        %v986 = vpop.permute.xlu0 %985
        %987 = vrot.lane.b32.xlu0 %v744, 112
        %v988 = vpop.permute.xlu0 %987
        %989 = vrot.lane.b32.xlu0 %v745, 112
        %v990 = vpop.permute.xlu0 %989
        %v991 = vsel %vm353, %v986, %v988
        %v992 = vsel %vm353, %v988, %v990
        %993 = vrot.lane.b32.xlu0 %v740, 15
        %v994 = vpop.permute.xlu0 %993
        %995 = vrot.lane.b32.xlu0 %v741, 15
        %v996 = vpop.permute.xlu0 %995
        %997 = vrot.lane.b32.xlu0 %v742, 15
        %v998 = vpop.permute.xlu0 %997
        %999 = vrot.lane.b32.xlu0 %v986, 15
        %v1000 = vpop.permute.xlu0 %999
        %1001 = vrot.lane.b32.xlu0 %v991, 15
        %v1002 = vpop.permute.xlu0 %1001
        %1003 = vrot.lane.b32.xlu0 %v992, 15
        %v1004 = vpop.permute.xlu0 %1003
        %1005 = vrot.lane.b32.xlu0 %v761, 15
        %v1006 = vpop.permute.xlu0 %1005
        %1007 = vrot.lane.b32.xlu0 %v766, 15
        %v1008 = vpop.permute.xlu0 %1007
        %1009 = vrot.lane.b32.xlu0 %v767, 15
        %v1010 = vpop.permute.xlu0 %1009
        %v1011 = vsel %vm622, %v994, %v996
        %v1012 = vsel %vm622, %v996, %v998
        %v1013 = vsel %vm622, %v1000, %v1002
        %v1014 = vsel %vm622, %v1002, %v1004
        %v1015 = vsel %vm622, %v1006, %v1008
        %v1016 = vsel %vm622, %v1008, %v1010
        %v1023 = vsel %vm602, %v1011, 0.0
        %v1024 = vsel %vm603, %v1012, 0.0
        %v1025 = vsel %vm602, %v1013, 0.0
        %v1026 = vsel %vm603, %v1014, 0.0
        %v1027 = vsel %vm602, %v1015, 0.0
        %v1028 = vsel %vm603, %v1016, 0.0
        %s1029 = scalar_lea.vmem [#allocation7], 8
        %v1030 = vld [vmem:[%s1029] sm:$0xf]
        %v1032 = vsel %vm443, %v1030, 0
        %1034 = vmatprep.subr.mxu0 0.0
        %1035 = vmatpush1.msra.mxu0 0.0
        %1036 = vmatprep.subr.mxu0 0.0
        %1037 = vmatpush1.msra.mxu0 0.0
        %1038 = vmatprep.subr.mxu0 0.0
        %1039 = vmatpush1.msra.mxu0 0.0
        %1040 = vmatprep.subr.mxu0 0.0
        %1041 = vmatpush1.msra.mxu0 0.0
        %1042 = vmatprep.subr.mxu0 0.0
        %1043 = vmatpush1.msra.mxu0 0.0
        %1044 = vmatprep.subr.mxu0 0.0
        %1045 = vmatpush1.msra.mxu0 0.0
        %1046 = vmatprep.subr.mxu0 0.0
        %1047 = vmatpush1.msra.mxu0 0.0
        %1048 = vmatprep.subr.mxu0 0.0
        %1049 = vmatpush1.msra.mxu0 0.0
        %1050 = vmatprep.subr.mxu0 0.0
        %1051 = vmatpush1.msra.mxu0 0.0
        %1052 = vmatprep.subr.mxu0 0.0
        %1053 = vmatpush1.msra.mxu0 0.0
        %1054 = vmatprep.subr.mxu0 0.0
        %1055 = vmatpush1.msra.mxu0 0.0
        %1056 = vmatprep.subr.mxu0 0.0
        %1057 = vmatpush1.msra.mxu0 0.0
        %1058 = vmatprep.subr.mxu0 0.0
        %1059 = vmatpush1.msra.mxu0 0.0
        %1060 = vmatprep.subr.mxu0 %v1028
        %1061 = vmatpush1.msra.mxu0 %v1027
        %1062 = vmatprep.subr.mxu0 %v1026
        %1063 = vmatpush1.msra.mxu0 %v1025
        %1064 = vmatprep.subr.mxu0 %v1024
        %1065 = vmatpush1.msra.mxu0 %v1023
        %1066 = vmatprep.subr.mxu0 0.0
        %1067 = vmatpush2.msra.mxu0 0.0
        %1068 = vmatprep.subr.mxu0 0.0
        %1069 = vmatpush2.msra.mxu0 0.0
        %1070 = vmatprep.subr.mxu0 0.0
        %1071 = vmatpush2.msra.mxu0 0.0
        %1072 = vmatprep.subr.mxu0 0.0
        %1073 = vmatpush2.msra.mxu0 0.0
        %1074 = vmatprep.subr.mxu0 0.0
        %1075 = vmatpush2.msra.mxu0 0.0
        %1076 = vmatprep.subr.mxu0 0.0
        %1077 = vmatpush2.msra.mxu0 0.0
        %1078 = vmatprep.subr.mxu0 0.0
        %1079 = vmatpush2.msra.mxu0 0.0
        %1080 = vmatprep.subr.mxu0 0.0
        %1081 = vmatpush2.msra.mxu0 0.0
        %1082 = vmatprep.subr.mxu0 0.0
        %1083 = vmatpush2.msra.mxu0 0.0
        %1084 = vmatprep.subr.mxu0 0.0
        %1085 = vmatpush2.msra.mxu0 0.0
        %1086 = vmatprep.subr.mxu0 0.0
        %1087 = vmatpush2.msra.mxu0 0.0
        %1088 = vmatprep.subr.mxu0 0.0
        %1089 = vmatpush2.msra.mxu0 0.0
        %1090 = vmatprep.subr.mxu0 0.0
        %1091 = vmatpush2.msra.mxu0 0.0
        %1092 = vmatprep.subr.mxu0 0.0
        %1093 = vmatpush2.msra.mxu0 0.0
        %1094 = vmatprep.subr.mxu0 0.0
        %1095 = vmatpush2.msra.mxu0 0.0
        %1096 = vmatprep.subr.mxu0 0.0
        %1097 = vmatpush2.msra.mxu0 0.0
        %1098 = vmatprep.mubr.f32.mxu0 0.0
        %1099 = vmatmul.mubr.f32.gmra.mxu0 %v1032
        %v1100 = vpop.f32.mrf.mxu0
        %v1101 = vadd.f32 0.0, %v1100
        %v1102 = vpop.f32.mrf.mxu0
        %v1103 = vadd.f32 0.0, %v1102
        %1104 = vdwg.mxu0
        %v1105 = vadd.f32 %v981, %v1101
        %v1106 = vadd.f32 %v983, %v1103
        %v1107 = vxor.u32 %v1105, 2147483648
        %v1108 = vxor.u32 %v1106, 2147483648
        %v1109 = vmul.f32 %v1107, 1.442695
        %v1110 = vpow.pop %v1109
        %v1111 = vmul.f32 %v1108, 1.442695
        %v1112 = vpow.pop %v1111
        %v1113 = vadd.f32 %v1110, 1.0
        %v1114 = vadd.f32 %v1112, 1.0
        %v1115 = vrcp.pop %v1113
        %v1116 = vmul.f32 1.0, %v1115
        %v1117 = vrcp.pop %v1114
        %v1118 = vmul.f32 1.0, %v1117
        %v1119 = vmul.f32 %v717, %v1116
        %v1120 = vmul.f32 %v718, %v1118
        %v1121 = vld [vmem:[%s238] sm:$0xff]
        %v1123 = vcombine.high %v1121, %v1121
        %v1125 = vadd.f32 %v1119, %v1121
        %v1126 = vadd.f32 %v1120, %v1123
        %v1129 = vcombine.low %v1125, %v1126
        %1131 = vst [vmem:[%s271] sm:$0xff] %v1129
        %s1132 = sand.u32 %s126, 1
        %s1133 = scalar_lea.sflag [#allocation6], %s1132
        %s1134 = sand.u32 %s126, 1
        %s1135 = smul.addr %s1134, 8
        %s1136 = scalar_lea.vmem [#allocation9], %s1135
        %p1137 = scmp.lt.s32.totalorder %s24, 1
        %s1138 = scalar_select %p1137, %s24, 1
        %s1139 = smul.addr %s1138, 2
        %s1140 = smul.addr %s1139, 4
        %s1141 = scalar_lea.vmem %s5, %s1140
        // Predicated region
        $region45: #{tpu_custom_call.1} parent=35 // pred_check
          %p1142 = pneg %p136
        $region46: #{tpu_custom_call.1} parent=35 // pred_check_branch
          %1144 = sbr.rel (%p1142) target = $region48
        $region47: #{tpu_custom_call.1} parent=35 // pred_region
          %s1146 = ssub.s32 128, 128
          %1147 = vsyncadd %s1133, %s1146
          %s1148 = smul.addr %s24, 2
          %s1149 = smul.addr %s1148, 64
          %s1150 = scalar_lea.hbm %s4, %s1149
          %s1152 = sshll.u32 %s1136, 4
          %s1153 = int_to_ptr.vmem [resolvable:$true] %s1152
          %1155 = dma.vmem_to_hbm [thread:$0]  %s1153, 128, %s1150, %s1133
        $region48: #{tpu_custom_call.1} parent=35 // pred_fallthru
          _
        // Predicated region
        $region49: #{tpu_custom_call.1} parent=35 // pred_check
          %p1156 = pneg %p162
        $region50: #{tpu_custom_call.1} parent=35 // pred_check_branch
          %1158 = sbr.rel (%p1156) target = $region52
        $region51: #{tpu_custom_call.1} parent=35 // pred_region
          _
        $region52: #{tpu_custom_call.1} parent=35 // pred_fallthru
          _
      $region36: #{tpu_custom_call.1} parent=5 // pred_fallthru
        _
      %p1159 = scmp.le.s32.totalorder 2, %s19
      // Predicated region
      $region53: #{tpu_custom_call.1} parent=5 // pred_check
        %p1160 = pneg %p1159
      $region54: #{tpu_custom_call.1} parent=5 // pred_check_branch
        %1162 = sbr.rel (%p1160) target = $region56
      $region55: #{tpu_custom_call.1} parent=5 // pred_region
        %s1163 = ssub.s32 %s19, 2
        // Predicated region
        $region57: #{tpu_custom_call.1} parent=55 // pred_check
          %p1164 = pneg %p142
        $region58: #{tpu_custom_call.1} parent=55 // pred_check_branch
          %1166 = sbr.rel (%p1164) target = $region60
        $region59: #{tpu_custom_call.1} parent=55 // pred_region
          %s1167 = sand.u32 %s127, 1
          %s1168 = scalar_lea.sflag [#allocation6], %s1167
          %s1169 = sand.u32 %s127, 1
          %s1170 = smul.addr %s1169, 8
          %s1171 = scalar_lea.vmem [#allocation9], %s1170
          %1172 = dma.done %s1168, 128
        $region60: #{tpu_custom_call.1} parent=55 // pred_fallthru
          _
        // Predicated region
        $region61: #{tpu_custom_call.1} parent=55 // pred_check
          %p1173 = pneg %p168
        $region62: #{tpu_custom_call.1} parent=55 // pred_check_branch
          %1175 = sbr.rel (%p1173) target = $region64
        $region63: #{tpu_custom_call.1} parent=55 // pred_region
          %p1176 = scmp.lt.s32.totalorder %s25, 1
          %s1177 = scalar_select %p1176, %s25, 1
          %s1178 = smul.addr %s1177, 2
          %s1179 = smul.addr %s1178, 4
          %s1180 = scalar_lea.vmem %s5, %s1179
        $region64: #{tpu_custom_call.1} parent=55 // pred_fallthru
          _
      $region56: #{tpu_custom_call.1} parent=5 // pred_fallthru
        _
    $region6: #{tpu_custom_call.1} parent=1 // loop_footer
      %s23 = sadd.s32 1, %s19
    $region7: #{tpu_custom_call.1} parent=1 // loop_footer_branch
      %18 = sbr.rel target = $region3
    $region8: #{tpu_custom_call.1} parent=1 // loop_exit
      _
    %1181 = vsyncpa [#allocation5], 1
    %s1182 = scalar_lea.sflag [#allocation5], 1
    %1183 = vsyncpa %s1182, 1
    %1184 = vsyncpa [#allocation8], 1
    %1185 = vsyncpa [#allocation6], 1
    %s1186 = scalar_lea.sflag [#allocation6], 1
    %1187 = vsyncpa %s1186, 1

</llo_original>
